<compile_context>
chip_gen: v7x
topology: tpu7x:2x2x1
jax: 0.10.0
libtpu: 0.0.40
codegen_flags: <defaults>
</compile_context>

<pallas_src>
import math
import functools

import jax
import jax.numpy as jnp
from jax.experimental import pallas as pl
from jax.experimental.pallas import tpu as pltpu

OUT_PAD = 128  # lane-dense decoder output width


def _layernorm(x, w, b, eps=1e-5):
    mu = jnp.mean(x, axis=-1, keepdims=True)
    xc = x - mu
    var = jnp.mean(xc * xc, axis=-1, keepdims=True)
    return xc * jax.lax.rsqrt(var + eps) * w + b


# ----------------------------------------------------------------------------
# Fused kernel: all encoder layers + attention pooling + MLP decoder
# ----------------------------------------------------------------------------
def fused_kernel(x_ref, wqkv_ref, bqkv_ref, wo_ref, bo_ref,
                 ln1w_ref, ln1b_ref, ln2w_ref, ln2b_ref,
                 w1_ref, b1_ref, w2_ref, b2_ref,
                 attw_ref, dw1_ref, db1_ref, dw2_ref, db2_ref,
                 o_ref, h_scr, *, nhead, bt, seq):
    l = pl.program_id(1)
    num_layers = pl.num_programs(1)
    D = h_scr.shape[-1]
    dh = D // nhead
    N = bt * seq
    bf16 = jnp.bfloat16
    f32 = jnp.float32

    # Load this batch tile into the resident VMEM activation at the first layer.
    @pl.when(l == 0)
    def _():
        h_scr[...] = x_ref[...].reshape(N, D)

    x = h_scr[...]                                            # (N, D) f32

    # ---- self-attention sublayer (pre-norm) ----
    h = _layernorm(x, ln1w_ref[0], ln1b_ref[0])
    qkv = jnp.dot(h.astype(bf16), wqkv_ref[0],
                  preferred_element_type=f32) + bqkv_ref[0]   # (N, 3D)

    wo = wo_ref[0]                                            # (D, D) bf16
    attn = jnp.zeros((N, D), f32)
    for hi in range(nhead):
        # 1/sqrt(dh) is folded into the Q weights/bias at init time.
        qh = qkv[:, hi * dh:(hi + 1) * dh].reshape(bt, seq, dh)
        kh = qkv[:, D + hi * dh:D + (hi + 1) * dh].reshape(bt, seq, dh)
        vh = qkv[:, 2 * D + hi * dh:2 * D + (hi + 1) * dh].reshape(bt, seq, dh)
        s = jnp.einsum('bqd,bkd->bqk', qh.astype(bf16), kh.astype(bf16),
                       preferred_element_type=f32)            # (bt, S, S)
        s = s - jnp.max(s, axis=-1, keepdims=True)
        p = jnp.exp(s)
        p = p * pl.reciprocal(jnp.sum(p, axis=-1, keepdims=True), approx=True)
        ctx = jnp.einsum('bqk,bkd->bqd', p.astype(bf16), vh.astype(bf16),
                         preferred_element_type=f32)          # (bt, S, dh)
        # Accumulate through the matching row-slice of W_out: no head concatenate.
        attn = attn + jnp.dot(ctx.reshape(N, dh).astype(bf16),
                              wo[hi * dh:(hi + 1) * dh, :],
                              preferred_element_type=f32)
    x = x + attn + bo_ref[0]

    # ---- feed-forward sublayer (pre-norm) ----
    h2 = _layernorm(x, ln2w_ref[0], ln2b_ref[0])
    f = jnp.dot(h2.astype(bf16), w1_ref[0], preferred_element_type=f32) + b1_ref[0]
    f = jnp.maximum(f, 0.0)
    f = jnp.dot(f.astype(bf16), w2_ref[0], preferred_element_type=f32) + b2_ref[0]
    x = x + f
    h_scr[...] = x

    # ---- after the last layer: attention pooling + MLP decoder ----
    @pl.when(l == num_layers - 1)
    def _():
        xf = x.reshape(bt, seq, D)
        # Linear(D, 1) scores; bias dropped (softmax over seq is shift-invariant).
        sc = jnp.sum(xf * attw_ref[...], axis=-1, keepdims=True)      # (bt, S, 1)
        sc = sc - jnp.max(sc, axis=1, keepdims=True)
        pe = jnp.exp(sc)
        pw = pe * pl.reciprocal(jnp.sum(pe, axis=1, keepdims=True), approx=True)
        pooled = jnp.sum(xf * pw, axis=1)                              # (bt, D)
        hd = jnp.dot(pooled.astype(bf16), dw1_ref[...],
                     preferred_element_type=f32) + db1_ref[0]
        hd = jnp.maximum(hd, 0.0)
        out = jnp.dot(hd.astype(bf16), dw2_ref[...],
                      preferred_element_type=f32) + db2_ref[0]         # (bt, OUT_PAD)
        o_ref[0] = out


# ----------------------------------------------------------------------------
# Wrapper
# ----------------------------------------------------------------------------
def _pick_batch_tile(batch, seq, target_rows=256):
    """Largest divisor of `batch` with <= target_rows rows per tile; keep at least
    two tiles when the batch allows so the "parallel" axis can feed both v7x TCs."""
    divisors = [d for d in range(1, batch + 1) if batch % d == 0]
    fitting = [d for d in divisors if d * seq <= target_rows] or [1]
    bt = max(fitting)
    if bt == batch and batch > 1:
        smaller = [d for d in fitting if d < batch]
        if smaller:
            bt = max(smaller)
    return bt


def attention_pooling_transformer_forward(src, params, *, nhead):
    """Mirrors AttentionPoolingTransformerEncoder.forward (eval mode, no masks)."""
    emb = params["embedding"]                     # sqrt(d_model) already folded in
    d_model = emb.shape[1]
    B, S = src.shape
    # embedding lookup + positional encoding (JAX glue; gather has no clean kernel fit)
    x = (emb[src] + params["pe"][:S]).astype(jnp.float32)     # (B, S, D)

    layer_arrays = (params["wqkv"], params["bqkv"], params["wo"], params["bo"],
                    params["ln1w"], params["ln1b"], params["ln2w"], params["ln2b"],
                    params["w1"], params["b1"], params["w2"], params["b2"])
    const_arrays = (params["att_w"], params["dec_w1"], params["dec_b1"],
                    params["dec_w2p"], params["dec_b2p"])
    num_layers = params["wqkv"].shape[0]
    output_dim = params["output_dim"]
    out_pad = params["dec_w2p"].shape[1]

    bt = _pick_batch_tile(B, S)
    nb = B // bt

    def layer_spec(arr):
        nz = arr.ndim - 1
        return pl.BlockSpec((1,) + arr.shape[1:],
                            lambda b, l, _nz=nz: (l,) + (0,) * _nz)

    def const_spec(arr):
        nd = arr.ndim
        return pl.BlockSpec(arr.shape, lambda b, l, _nd=nd: (0,) * _nd)

    in_specs = ([pl.BlockSpec((bt, S, d_model), lambda b, l: (b, 0, 0))]
                + [layer_spec(a) for a in layer_arrays]
                + [const_spec(a) for a in const_arrays])
    out_spec = pl.BlockSpec((1, bt, out_pad), lambda b, l: (b, 0, 0))

    kernel = functools.partial(fused_kernel, nhead=nhead, bt=bt, seq=S)
    out = pl.pallas_call(
        kernel,
        out_shape=jax.ShapeDtypeStruct((nb, bt, out_pad), jnp.float32),
        grid=(nb, num_layers),
        in_specs=in_specs,
        out_specs=out_spec,
        scratch_shapes=[pltpu.VMEM((bt * S, d_model), jnp.float32)],
        compiler_params=pltpu.CompilerParams(
            dimension_semantics=("parallel", "arbitrary"),
            vmem_limit_bytes=32 * 1024 * 1024),
    )(x, *layer_arrays, *const_arrays)
    return out.reshape(B, out_pad)[:, :output_dim]


# ----------------------------------------------------------------------------
# Pure-JAX f32 reference (same folded params) for a sanity check
# ----------------------------------------------------------------------------
def reference_forward(src, params, *, nhead):
    emb = params["embedding"]
    D = emb.shape[1]
    B, S = src.shape
    dh = D // nhead
    x = (emb[src] + params["pe"][:S]).astype(jnp.float32)
    L = params["wqkv"].shape[0]
    for l in range(L):
        h = _layernorm(x, params["ln1w"][l], params["ln1b"][l])
        qkv = h @ params["wqkv"][l].astype(jnp.float32) + params["bqkv"][l]
        wo = params["wo"][l].astype(jnp.float32)
        attn = jnp.zeros_like(x)
        for hi in range(nhead):
            qh = qkv[..., hi * dh:(hi + 1) * dh]
            kh = qkv[..., D + hi * dh:D + (hi + 1) * dh]
            vh = qkv[..., 2 * D + hi * dh:2 * D + (hi + 1) * dh]
            s = jnp.einsum('bqd,bkd->bqk', qh, kh)
            p = jax.nn.softmax(s, axis=-1)
            ctx = jnp.einsum('bqk,bkd->bqd', p, vh)
            attn = attn + ctx @ wo[hi * dh:(hi + 1) * dh, :]
        x = x + attn + params["bo"][l]
        h2 = _layernorm(x, params["ln2w"][l], params["ln2b"][l])
        f = jnp.maximum(h2 @ params["w1"][l].astype(jnp.float32) + params["b1"][l], 0.0)
        f = f @ params["w2"][l].astype(jnp.float32) + params["b2"][l]
        x = x + f
    sc = jnp.sum(x * params["att_w"], axis=-1, keepdims=True)
    pw = jax.nn.softmax(sc, axis=1)
    pooled = jnp.sum(x * pw, axis=1)
    hd = jnp.maximum(pooled @ params["dec_w1"].astype(jnp.float32) + params["dec_b1"], 0.0)
    out = hd @ params["dec_w2p"].astype(jnp.float32) + params["dec_b2p"]
    return out[:, :params["output_dim"]]


# ----------------------------------------------------------------------------
# Deterministic parameter construction
# ----------------------------------------------------------------------------
def make_positional_encoding(max_len, d_model):
    pos = jnp.arange(max_len, dtype=jnp.float32)[:, None]
    div = jnp.exp(jnp.arange(0, d_model, 2, dtype=jnp.float32)
                  * (-math.log(10000.0) / d_model))
    pe = jnp.zeros((max_len, d_model), dtype=jnp.float32)
    pe = pe.at[:, 0::2].set(jnp.sin(pos * div))
    pe = pe.at[:, 1::2].set(jnp.cos(pos * div))
    return pe


def init_params(key, *, vocab_size, d_model, nhead, num_layers, dim_feedforward,
                max_len, mlp_hidden, output_dim):
    assert d_model % nhead == 0
    assert output_dim <= OUT_PAD
    dh = d_model // nhead
    bf16 = jnp.bfloat16

    def nrm(k, shape, scale=0.05):
        return scale * jax.random.normal(k, shape, dtype=jnp.float32)

    keys = iter(jax.random.split(key, 8 * num_layers + 16))

    # embedding with sqrt(d_model) scale folded in
    emb = nrm(next(keys), (vocab_size, d_model), 1.0) * math.sqrt(d_model)

    wqkv, bqkv, wo, bo = [], [], [], []
    ln1w, ln1b, ln2w, ln2b = [], [], [], []
    w1, b1, w2, b2 = [], [], [], []
    q_scale = 1.0 / math.sqrt(dh)
    for _ in range(num_layers):
        wq = nrm(next(keys), (d_model, 3 * d_model))
        bq = nrm(next(keys), (1, 3 * d_model))
        # fold attention 1/sqrt(dh) into the Q third of the in_proj
        wq = wq.at[:, :d_model].multiply(q_scale)
        bq = bq.at[:, :d_model].multiply(q_scale)
        wqkv.append(wq); bqkv.append(bq)
        wo.append(nrm(next(keys), (d_model, d_model)))
        bo.append(nrm(next(keys), (1, d_model)))
        ln1w.append(jnp.ones((1, d_model), jnp.float32))
        ln1b.append(jnp.zeros((1, d_model), jnp.float32))
        ln2w.append(jnp.ones((1, d_model), jnp.float32))
        ln2b.append(jnp.zeros((1, d_model), jnp.float32))
        w1.append(nrm(next(keys), (d_model, dim_feedforward)))
        b1.append(nrm(next(keys), (1, dim_feedforward)))
        w2.append(nrm(next(keys), (dim_feedforward, d_model)))
        b2.append(nrm(next(keys), (1, d_model)))

    dec_w2 = nrm(next(keys), (mlp_hidden, output_dim))
    dec_b2 = nrm(next(keys), (1, output_dim))
    dec_w2p = jnp.zeros((mlp_hidden, OUT_PAD), jnp.float32).at[:, :output_dim].set(dec_w2)
    dec_b2p = jnp.zeros((1, OUT_PAD), jnp.float32).at[:, :output_dim].set(dec_b2)

    return {
        "embedding": emb,
        "pe": make_positional_encoding(max_len, d_model),
        # per-layer weights stacked on a leading L axis; matmul weights in bf16
        "wqkv": jnp.stack(wqkv).astype(bf16), "bqkv": jnp.stack(bqkv),
        "wo": jnp.stack(wo).astype(bf16), "bo": jnp.stack(bo),
        "ln1w": jnp.stack(ln1w), "ln1b": jnp.stack(ln1b),
        "ln2w": jnp.stack(ln2w), "ln2b": jnp.stack(ln2b),
        "w1": jnp.stack(w1).astype(bf16), "b1": jnp.stack(b1),
        "w2": jnp.stack(w2).astype(bf16), "b2": jnp.stack(b2),
        # attention pooling (bias dropped: softmax over seq is shift-invariant)
        "att_w": nrm(next(keys), (1, d_model)),
        # decoder SimpleMLP, second layer padded to OUT_PAD lanes
        "dec_w1": nrm(next(keys), (d_model, mlp_hidden)).astype(bf16),
        "dec_b1": nrm(next(keys), (1, mlp_hidden)),
        "dec_w2p": dec_w2p.astype(bf16),
        "dec_b2p": dec_b2p,
        "output_dim": output_dim,
    }


# ----------------------------------------------------------------------------
if __name__ == "__main__":
    B, S = 2, 8
    vocab_size, d_model, nhead = 16, 32, 4
    num_layers, dim_feedforward, max_len = 2, 64, 16
    mlp_hidden, output_dim = 32, 4

    key = jax.random.PRNGKey(0)
    k_params, k_src = jax.random.split(key)
    params = init_params(
        k_params, vocab_size=vocab_size, d_model=d_model, nhead=nhead,
        num_layers=num_layers, dim_feedforward=dim_feedforward, max_len=max_len,
        mlp_hidden=mlp_hidden, output_dim=output_dim)

    # TODO(synk): dropout layers are eval-mode no-ops and are intentionally omitted.
    src = jax.random.randint(k_src, (B, S), 0, vocab_size, dtype=jnp.int32)

    out = attention_pooling_transformer_forward(src, params, nhead=nhead)
    out = jax.block_until_ready(out)
    assert out.shape == (B, output_dim) and out.dtype == jnp.float32
    assert bool(jnp.all(jnp.isfinite(out)))

    # sanity check vs a pure-JAX f32 reference (kernel uses bf16 matmuls -> loose tol)
    ref = jax.block_until_ready(reference_forward(src, params, nhead=nhead))
    max_err = float(jnp.max(jnp.abs(out - ref)))
    assert max_err < 5e-2, f"max abs error vs reference too large: {max_err}"

    print("KERNEL_OK")
</pallas_src>

<mosaic_0001>
module attributes {stable_mosaic.version = 11 : i64} {
  func.func @fused_kernel(%arg0: i32, %arg1: i32, %arg2: memref<1x8x32xf32, #tpu.memory_space<vmem>>, %arg3: memref<1x32x96xbf16, #tpu.memory_space<vmem>>, %arg4: memref<1x1x96xf32, #tpu.memory_space<vmem>>, %arg5: memref<1x32x32xbf16, #tpu.memory_space<vmem>>, %arg6: memref<1x1x32xf32, #tpu.memory_space<vmem>>, %arg7: memref<1x1x32xf32, #tpu.memory_space<vmem>>, %arg8: memref<1x1x32xf32, #tpu.memory_space<vmem>>, %arg9: memref<1x1x32xf32, #tpu.memory_space<vmem>>, %arg10: memref<1x1x32xf32, #tpu.memory_space<vmem>>, %arg11: memref<1x32x64xbf16, #tpu.memory_space<vmem>>, %arg12: memref<1x1x64xf32, #tpu.memory_space<vmem>>, %arg13: memref<1x64x32xbf16, #tpu.memory_space<vmem>>, %arg14: memref<1x1x32xf32, #tpu.memory_space<vmem>>, %arg15: memref<1x32xf32, #tpu.memory_space<vmem>>, %arg16: memref<32x32xbf16, #tpu.memory_space<vmem>>, %arg17: memref<1x32xf32, #tpu.memory_space<vmem>>, %arg18: memref<32x128xbf16, #tpu.memory_space<vmem>>, %arg19: memref<1x128xf32, #tpu.memory_space<vmem>>, %arg20: memref<1x1x128xf32, #tpu.memory_space<vmem>>, %arg21: memref<8x32xf32, #tpu.memory_space<vmem>>) attributes {dimension_semantics = [#tpu.dimension_semantics<parallel>, #tpu.dimension_semantics<arbitrary>], iteration_bounds = array<i64: 2, 2>, scalar_prefetch = 0 : i64, scratch_operands = 1 : i64, tpu.core_type = #tpu.core_type<tc>, window_params = [{transform_indices = @transform_0, window_bounds = array<i64: 1, 8, 32>}, {transform_indices = @transform_1, window_bounds = array<i64: 1, 32, 96>}, {transform_indices = @transform_2, window_bounds = array<i64: 1, 1, 96>}, {transform_indices = @transform_3, window_bounds = array<i64: 1, 32, 32>}, {transform_indices = @transform_4, window_bounds = array<i64: 1, 1, 32>}, {transform_indices = @transform_5, window_bounds = array<i64: 1, 1, 32>}, {transform_indices = @transform_6, window_bounds = array<i64: 1, 1, 32>}, {transform_indices = @transform_7, window_bounds = array<i64: 1, 1, 32>}, {transform_indices = @transform_8, window_bounds = array<i64: 1, 1, 32>}, {transform_indices = @transform_9, window_bounds = array<i64: 1, 32, 64>}, {transform_indices = @transform_10, window_bounds = array<i64: 1, 1, 64>}, {transform_indices = @transform_11, window_bounds = array<i64: 1, 64, 32>}, {transform_indices = @transform_12, window_bounds = array<i64: 1, 1, 32>}, {pipeline_mode = #tpu.pipeline_mode<synchronous>, transform_indices = @transform_13, window_bounds = array<i64: 1, 32>}, {pipeline_mode = #tpu.pipeline_mode<synchronous>, transform_indices = @transform_14, window_bounds = array<i64: 32, 32>}, {pipeline_mode = #tpu.pipeline_mode<synchronous>, transform_indices = @transform_15, window_bounds = array<i64: 1, 32>}, {pipeline_mode = #tpu.pipeline_mode<synchronous>, transform_indices = @transform_16, window_bounds = array<i64: 32, 128>}, {pipeline_mode = #tpu.pipeline_mode<synchronous>, transform_indices = @transform_17, window_bounds = array<i64: 1, 128>}, {transform_indices = @transform_18, window_bounds = array<i64: 1, 1, 128>}]} {
    %c0_i32 = arith.constant 0 : i32
    %0 = arith.cmpi eq, %arg1, %c0_i32 : i32
    %1 = arith.extui %0 : i1 to i32
    %c0_i32_0 = arith.constant 0 : i32
    %2 = arith.cmpi ne, %1, %c0_i32_0 : i32
    scf.if %2 {
      %c0_75 = arith.constant 0 : index
      %c0_76 = arith.constant 0 : index
      %c0_77 = arith.constant 0 : index
      %199 = vector.load %arg2[%c0_75, %c0_76, %c0_77] : memref<1x8x32xf32, #tpu.memory_space<vmem>>, vector<1x8x32xf32>
      %200 = vector.shape_cast %199 : vector<1x8x32xf32> to vector<8x32xf32>
      %c0_78 = arith.constant 0 : index
      %c0_79 = arith.constant 0 : index
      %201 = vector.load %arg21[%c0_78, %c0_79] : memref<8x32xf32, #tpu.memory_space<vmem>>, vector<8x32xf32>
      tpu.vector_store %arg21[%c0_78, %c0_79], %200 {strides = array<i32>} : memref<8x32xf32, #tpu.memory_space<vmem>>, vector<8x32xf32>,
    } else {
    }
    %c0 = arith.constant 0 : index
    %c0_1 = arith.constant 0 : index
    %3 = vector.load %arg21[%c0, %c0_1] : memref<8x32xf32, #tpu.memory_space<vmem>>, vector<8x32xf32>
    %c0_2 = arith.constant 0 : index
    %c0_3 = arith.constant 0 : index
    %c0_4 = arith.constant 0 : index
    %4 = vector.load %arg7[%c0_2, %c0_3, %c0_4] : memref<1x1x32xf32, #tpu.memory_space<vmem>>, vector<1x1x32xf32>
    %5 = vector.shape_cast %4 : vector<1x1x32xf32> to vector<1x32xf32>
    %c0_5 = arith.constant 0 : index
    %c0_6 = arith.constant 0 : index
    %c0_7 = arith.constant 0 : index
    %6 = vector.load %arg8[%c0_5, %c0_6, %c0_7] : memref<1x1x32xf32, #tpu.memory_space<vmem>>, vector<1x1x32xf32>
    %7 = vector.shape_cast %6 : vector<1x1x32xf32> to vector<1x32xf32>
    %cst = arith.constant dense<0.000000e+00> : vector<8xf32>
    %8 = vector.multi_reduction <add>, %3, %cst [1] : vector<8x32xf32> to vector<8xf32>
    %9 = vector.shape_cast %8 : vector<8xf32> to vector<8x1xf32>
    %cst_8 = arith.constant 3.200000e+01 : f32
    %10 = vector.broadcast %cst_8 : f32 to vector<8x1xf32>
    %11 = arith.divf %9, %10 : vector<8x1xf32>
    %12 = vector.broadcast %11 : vector<8x1xf32> to vector<8x32xf32>
    %13 = arith.subf %3, %12 : vector<8x32xf32>
    %14 = arith.mulf %13, %13 : vector<8x32xf32>
    %cst_9 = arith.constant dense<0.000000e+00> : vector<8xf32>
    %15 = vector.multi_reduction <add>, %14, %cst_9 [1] : vector<8x32xf32> to vector<8xf32>
    %16 = vector.shape_cast %15 : vector<8xf32> to vector<8x1xf32>
    %cst_10 = arith.constant 3.200000e+01 : f32
    %17 = vector.broadcast %cst_10 : f32 to vector<8x1xf32>
    %18 = arith.divf %16, %17 : vector<8x1xf32>
    %cst_11 = arith.constant 9.99999974E-6 : f32
    %19 = vector.broadcast %cst_11 : f32 to vector<8x1xf32>
    %20 = arith.addf %18, %19 : vector<8x1xf32>
    %21 = math.rsqrt %20 : vector<8x1xf32>
    %22 = vector.broadcast %21 : vector<8x1xf32> to vector<8x32xf32>
    %23 = arith.mulf %13, %22 : vector<8x32xf32>
    %24 = vector.broadcast %5 : vector<1x32xf32> to vector<8x32xf32>
    %25 = arith.mulf %23, %24 : vector<8x32xf32>
    %26 = vector.broadcast %7 : vector<1x32xf32> to vector<8x32xf32>
    %27 = arith.addf %25, %26 : vector<8x32xf32>
    %28 = arith.truncf %27 : vector<8x32xf32> to vector<8x32xbf16>
    %c0_12 = arith.constant 0 : index
    %c0_13 = arith.constant 0 : index
    %c0_14 = arith.constant 0 : index
    %29 = vector.load %arg3[%c0_12, %c0_13, %c0_14] : memref<1x32x96xbf16, #tpu.memory_space<vmem>>, vector<1x32x96xbf16>
    %30 = vector.shape_cast %29 : vector<1x32x96xbf16> to vector<32x96xbf16>
    %cst_15 = arith.constant dense<0.000000e+00> : vector<8x96xf32>
    %31 = tpu.matmul %28, %30, %cst_15 {dimension_numbers = #tpu.dot_dimension_numbers<[1], [0], [0], [1], [0, 0, 1, 1], [], []>} : vector<8x32xbf16>, vector<32x96xbf16>, vector<8x96xf32> -> vector<8x96xf32>
    %c0_16 = arith.constant 0 : index
    %c0_17 = arith.constant 0 : index
    %c0_18 = arith.constant 0 : index
    %32 = vector.load %arg4[%c0_16, %c0_17, %c0_18] : memref<1x1x96xf32, #tpu.memory_space<vmem>>, vector<1x1x96xf32>
    %33 = vector.shape_cast %32 : vector<1x1x96xf32> to vector<1x96xf32>
    %34 = vector.broadcast %33 : vector<1x96xf32> to vector<8x96xf32>
    %35 = arith.addf %31, %34 : vector<8x96xf32>
    %c0_19 = arith.constant 0 : index
    %c0_20 = arith.constant 0 : index
    %c0_21 = arith.constant 0 : index
    %36 = vector.load %arg5[%c0_19, %c0_20, %c0_21] : memref<1x32x32xbf16, #tpu.memory_space<vmem>>, vector<1x32x32xbf16>
    %37 = vector.shape_cast %36 : vector<1x32x32xbf16> to vector<32x32xbf16>
    %cst_22 = arith.constant 0.000000e+00 : f32
    %38 = vector.broadcast %cst_22 : f32 to vector<8x32xf32>
    %39 = vector.extract_strided_slice %35 {offsets = [0, 0], sizes = [8, 8], strides = [1, 1]} : vector<8x96xf32> to vector<8x8xf32>
    %40 = vector.shape_cast %39 : vector<8x8xf32> to vector<1x8x8xf32>
    %41 = vector.extract_strided_slice %35 {offsets = [0, 32], sizes = [8, 8], strides = [1, 1]} : vector<8x96xf32> to vector<8x8xf32>
    %42 = vector.shape_cast %41 : vector<8x8xf32> to vector<1x8x8xf32>
    %43 = vector.extract_strided_slice %35 {offsets = [0, 64], sizes = [8, 8], strides = [1, 1]} : vector<8x96xf32> to vector<8x8xf32>
    %44 = vector.shape_cast %43 : vector<8x8xf32> to vector<1x8x8xf32>
    %45 = arith.truncf %40 : vector<1x8x8xf32> to vector<1x8x8xbf16>
    %46 = arith.truncf %42 : vector<1x8x8xf32> to vector<1x8x8xbf16>
    "tpu.trace_start"() <{level = 10 : i32, message = "bqd,bkd->bqk"}> : () -> ()
    %cst_23 = arith.constant dense<0.000000e+00> : vector<1x8x8xf32>
    %47 = tpu.matmul %45, %46, %cst_23 {dimension_numbers = #tpu.dot_dimension_numbers<[2], [2], [1], [1], [0, 0, 0, 1, 1, 1], [0], [0]>} : vector<1x8x8xbf16>, vector<1x8x8xbf16>, vector<1x8x8xf32> -> vector<1x8x8xf32>
    "tpu.trace_stop"() : () -> ()
    %cst_24 = arith.constant dense<0xFF800000> : vector<1x8xf32>
    %48 = vector.multi_reduction <maximumf>, %47, %cst_24 [2] : vector<1x8x8xf32> to vector<1x8xf32>
    %49 = vector.shape_cast %48 : vector<1x8xf32> to vector<1x8x1xf32>
    %50 = vector.broadcast %49 : vector<1x8x1xf32> to vector<1x8x8xf32>
    %51 = arith.subf %47, %50 : vector<1x8x8xf32>
    %52 = math.exp %51 : vector<1x8x8xf32>
    %cst_25 = arith.constant dense<0.000000e+00> : vector<1x8xf32>
    %53 = vector.multi_reduction <add>, %52, %cst_25 [2] : vector<1x8x8xf32> to vector<1x8xf32>
    %54 = vector.shape_cast %53 : vector<1x8xf32> to vector<1x8x1xf32>
    %55 = tpu.reciprocal %54 {approx = true} : vector<1x8x1xf32> -> vector<1x8x1xf32>
    %56 = vector.broadcast %55 : vector<1x8x1xf32> to vector<1x8x8xf32>
    %57 = arith.mulf %52, %56 : vector<1x8x8xf32>
    %58 = arith.truncf %57 : vector<1x8x8xf32> to vector<1x8x8xbf16>
    %59 = arith.truncf %44 : vector<1x8x8xf32> to vector<1x8x8xbf16>
    "tpu.trace_start"() <{level = 10 : i32, message = "bqk,bkd->bqd"}> : () -> ()
    %cst_26 = arith.constant dense<0.000000e+00> : vector<1x8x8xf32>
    %60 = tpu.matmul %58, %59, %cst_26 {dimension_numbers = #tpu.dot_dimension_numbers<[2], [1], [1], [2], [0, 0, 0, 1, 1, 2], [0], [0]>} : vector<1x8x8xbf16>, vector<1x8x8xbf16>, vector<1x8x8xf32> -> vector<1x8x8xf32>
    "tpu.trace_stop"() : () -> ()
    %61 = vector.shape_cast %60 : vector<1x8x8xf32> to vector<8x8xf32>
    %62 = arith.truncf %61 : vector<8x8xf32> to vector<8x8xbf16>
    %63 = vector.extract_strided_slice %37 {offsets = [0, 0], sizes = [8, 32], strides = [1, 1]} : vector<32x32xbf16> to vector<8x32xbf16>
    %cst_27 = arith.constant dense<0.000000e+00> : vector<8x32xf32>
    %64 = tpu.matmul %62, %63, %cst_27 {dimension_numbers = #tpu.dot_dimension_numbers<[1], [0], [0], [1], [0, 0, 1, 1], [], []>} : vector<8x8xbf16>, vector<8x32xbf16>, vector<8x32xf32> -> vector<8x32xf32>
    %65 = arith.addf %38, %64 : vector<8x32xf32>
    %66 = vector.extract_strided_slice %35 {offsets = [0, 8], sizes = [8, 8], strides = [1, 1]} : vector<8x96xf32> to vector<8x8xf32>
    %67 = vector.shape_cast %66 : vector<8x8xf32> to vector<1x8x8xf32>
    %68 = vector.extract_strided_slice %35 {offsets = [0, 40], sizes = [8, 8], strides = [1, 1]} : vector<8x96xf32> to vector<8x8xf32>
    %69 = vector.shape_cast %68 : vector<8x8xf32> to vector<1x8x8xf32>
    %70 = vector.extract_strided_slice %35 {offsets = [0, 72], sizes = [8, 8], strides = [1, 1]} : vector<8x96xf32> to vector<8x8xf32>
    %71 = vector.shape_cast %70 : vector<8x8xf32> to vector<1x8x8xf32>
    %72 = arith.truncf %67 : vector<1x8x8xf32> to vector<1x8x8xbf16>
    %73 = arith.truncf %69 : vector<1x8x8xf32> to vector<1x8x8xbf16>
    "tpu.trace_start"() <{level = 10 : i32, message = "bqd,bkd->bqk"}> : () -> ()
    %cst_28 = arith.constant dense<0.000000e+00> : vector<1x8x8xf32>
    %74 = tpu.matmul %72, %73, %cst_28 {dimension_numbers = #tpu.dot_dimension_numbers<[2], [2], [1], [1], [0, 0, 0, 1, 1, 1], [0], [0]>} : vector<1x8x8xbf16>, vector<1x8x8xbf16>, vector<1x8x8xf32> -> vector<1x8x8xf32>
    "tpu.trace_stop"() : () -> ()
    %cst_29 = arith.constant dense<0xFF800000> : vector<1x8xf32>
    %75 = vector.multi_reduction <maximumf>, %74, %cst_29 [2] : vector<1x8x8xf32> to vector<1x8xf32>
    %76 = vector.shape_cast %75 : vector<1x8xf32> to vector<1x8x1xf32>
    %77 = vector.broadcast %76 : vector<1x8x1xf32> to vector<1x8x8xf32>
    %78 = arith.subf %74, %77 : vector<1x8x8xf32>
    %79 = math.exp %78 : vector<1x8x8xf32>
    %cst_30 = arith.constant dense<0.000000e+00> : vector<1x8xf32>
    %80 = vector.multi_reduction <add>, %79, %cst_30 [2] : vector<1x8x8xf32> to vector<1x8xf32>
    %81 = vector.shape_cast %80 : vector<1x8xf32> to vector<1x8x1xf32>
    %82 = tpu.reciprocal %81 {approx = true} : vector<1x8x1xf32> -> vector<1x8x1xf32>
    %83 = vector.broadcast %82 : vector<1x8x1xf32> to vector<1x8x8xf32>
    %84 = arith.mulf %79, %83 : vector<1x8x8xf32>
    %85 = arith.truncf %84 : vector<1x8x8xf32> to vector<1x8x8xbf16>
    %86 = arith.truncf %71 : vector<1x8x8xf32> to vector<1x8x8xbf16>
    "tpu.trace_start"() <{level = 10 : i32, message = "bqk,bkd->bqd"}> : () -> ()
    %cst_31 = arith.constant dense<0.000000e+00> : vector<1x8x8xf32>
    %87 = tpu.matmul %85, %86, %cst_31 {dimension_numbers = #tpu.dot_dimension_numbers<[2], [1], [1], [2], [0, 0, 0, 1, 1, 2], [0], [0]>} : vector<1x8x8xbf16>, vector<1x8x8xbf16>, vector<1x8x8xf32> -> vector<1x8x8xf32>
    "tpu.trace_stop"() : () -> ()
    %88 = vector.shape_cast %87 : vector<1x8x8xf32> to vector<8x8xf32>
    %89 = arith.truncf %88 : vector<8x8xf32> to vector<8x8xbf16>
    %90 = vector.extract_strided_slice %37 {offsets = [8, 0], sizes = [8, 32], strides = [1, 1]} : vector<32x32xbf16> to vector<8x32xbf16>
    %cst_32 = arith.constant dense<0.000000e+00> : vector<8x32xf32>
    %91 = tpu.matmul %89, %90, %cst_32 {dimension_numbers = #tpu.dot_dimension_numbers<[1], [0], [0], [1], [0, 0, 1, 1], [], []>} : vector<8x8xbf16>, vector<8x32xbf16>, vector<8x32xf32> -> vector<8x32xf32>
    %92 = arith.addf %65, %91 : vector<8x32xf32>
    %93 = vector.extract_strided_slice %35 {offsets = [0, 16], sizes = [8, 8], strides = [1, 1]} : vector<8x96xf32> to vector<8x8xf32>
    %94 = vector.shape_cast %93 : vector<8x8xf32> to vector<1x8x8xf32>
    %95 = vector.extract_strided_slice %35 {offsets = [0, 48], sizes = [8, 8], strides = [1, 1]} : vector<8x96xf32> to vector<8x8xf32>
    %96 = vector.shape_cast %95 : vector<8x8xf32> to vector<1x8x8xf32>
    %97 = vector.extract_strided_slice %35 {offsets = [0, 80], sizes = [8, 8], strides = [1, 1]} : vector<8x96xf32> to vector<8x8xf32>
    %98 = vector.shape_cast %97 : vector<8x8xf32> to vector<1x8x8xf32>
    %99 = arith.truncf %94 : vector<1x8x8xf32> to vector<1x8x8xbf16>
    %100 = arith.truncf %96 : vector<1x8x8xf32> to vector<1x8x8xbf16>
    "tpu.trace_start"() <{level = 10 : i32, message = "bqd,bkd->bqk"}> : () -> ()
    %cst_33 = arith.constant dense<0.000000e+00> : vector<1x8x8xf32>
    %101 = tpu.matmul %99, %100, %cst_33 {dimension_numbers = #tpu.dot_dimension_numbers<[2], [2], [1], [1], [0, 0, 0, 1, 1, 1], [0], [0]>} : vector<1x8x8xbf16>, vector<1x8x8xbf16>, vector<1x8x8xf32> -> vector<1x8x8xf32>
    "tpu.trace_stop"() : () -> ()
    %cst_34 = arith.constant dense<0xFF800000> : vector<1x8xf32>
    %102 = vector.multi_reduction <maximumf>, %101, %cst_34 [2] : vector<1x8x8xf32> to vector<1x8xf32>
    %103 = vector.shape_cast %102 : vector<1x8xf32> to vector<1x8x1xf32>
    %104 = vector.broadcast %103 : vector<1x8x1xf32> to vector<1x8x8xf32>
    %105 = arith.subf %101, %104 : vector<1x8x8xf32>
    %106 = math.exp %105 : vector<1x8x8xf32>
    %cst_35 = arith.constant dense<0.000000e+00> : vector<1x8xf32>
    %107 = vector.multi_reduction <add>, %106, %cst_35 [2] : vector<1x8x8xf32> to vector<1x8xf32>
    %108 = vector.shape_cast %107 : vector<1x8xf32> to vector<1x8x1xf32>
    %109 = tpu.reciprocal %108 {approx = true} : vector<1x8x1xf32> -> vector<1x8x1xf32>
    %110 = vector.broadcast %109 : vector<1x8x1xf32> to vector<1x8x8xf32>
    %111 = arith.mulf %106, %110 : vector<1x8x8xf32>
    %112 = arith.truncf %111 : vector<1x8x8xf32> to vector<1x8x8xbf16>
    %113 = arith.truncf %98 : vector<1x8x8xf32> to vector<1x8x8xbf16>
    "tpu.trace_start"() <{level = 10 : i32, message = "bqk,bkd->bqd"}> : () -> ()
    %cst_36 = arith.constant dense<0.000000e+00> : vector<1x8x8xf32>
    %114 = tpu.matmul %112, %113, %cst_36 {dimension_numbers = #tpu.dot_dimension_numbers<[2], [1], [1], [2], [0, 0, 0, 1, 1, 2], [0], [0]>} : vector<1x8x8xbf16>, vector<1x8x8xbf16>, vector<1x8x8xf32> -> vector<1x8x8xf32>
    "tpu.trace_stop"() : () -> ()
    %115 = vector.shape_cast %114 : vector<1x8x8xf32> to vector<8x8xf32>
    %116 = arith.truncf %115 : vector<8x8xf32> to vector<8x8xbf16>
    %117 = vector.extract_strided_slice %37 {offsets = [16, 0], sizes = [8, 32], strides = [1, 1]} : vector<32x32xbf16> to vector<8x32xbf16>
    %cst_37 = arith.constant dense<0.000000e+00> : vector<8x32xf32>
    %118 = tpu.matmul %116, %117, %cst_37 {dimension_numbers = #tpu.dot_dimension_numbers<[1], [0], [0], [1], [0, 0, 1, 1], [], []>} : vector<8x8xbf16>, vector<8x32xbf16>, vector<8x32xf32> -> vector<8x32xf32>
    %119 = arith.addf %92, %118 : vector<8x32xf32>
    %120 = vector.extract_strided_slice %35 {offsets = [0, 24], sizes = [8, 8], strides = [1, 1]} : vector<8x96xf32> to vector<8x8xf32>
    %121 = vector.shape_cast %120 : vector<8x8xf32> to vector<1x8x8xf32>
    %122 = vector.extract_strided_slice %35 {offsets = [0, 56], sizes = [8, 8], strides = [1, 1]} : vector<8x96xf32> to vector<8x8xf32>
    %123 = vector.shape_cast %122 : vector<8x8xf32> to vector<1x8x8xf32>
    %124 = vector.extract_strided_slice %35 {offsets = [0, 88], sizes = [8, 8], strides = [1, 1]} : vector<8x96xf32> to vector<8x8xf32>
    %125 = vector.shape_cast %124 : vector<8x8xf32> to vector<1x8x8xf32>
    %126 = arith.truncf %121 : vector<1x8x8xf32> to vector<1x8x8xbf16>
    %127 = arith.truncf %123 : vector<1x8x8xf32> to vector<1x8x8xbf16>
    "tpu.trace_start"() <{level = 10 : i32, message = "bqd,bkd->bqk"}> : () -> ()
    %cst_38 = arith.constant dense<0.000000e+00> : vector<1x8x8xf32>
    %128 = tpu.matmul %126, %127, %cst_38 {dimension_numbers = #tpu.dot_dimension_numbers<[2], [2], [1], [1], [0, 0, 0, 1, 1, 1], [0], [0]>} : vector<1x8x8xbf16>, vector<1x8x8xbf16>, vector<1x8x8xf32> -> vector<1x8x8xf32>
    "tpu.trace_stop"() : () -> ()
    %cst_39 = arith.constant dense<0xFF800000> : vector<1x8xf32>
    %129 = vector.multi_reduction <maximumf>, %128, %cst_39 [2] : vector<1x8x8xf32> to vector<1x8xf32>
    %130 = vector.shape_cast %129 : vector<1x8xf32> to vector<1x8x1xf32>
    %131 = vector.broadcast %130 : vector<1x8x1xf32> to vector<1x8x8xf32>
    %132 = arith.subf %128, %131 : vector<1x8x8xf32>
    %133 = math.exp %132 : vector<1x8x8xf32>
    %cst_40 = arith.constant dense<0.000000e+00> : vector<1x8xf32>
    %134 = vector.multi_reduction <add>, %133, %cst_40 [2] : vector<1x8x8xf32> to vector<1x8xf32>
    %135 = vector.shape_cast %134 : vector<1x8xf32> to vector<1x8x1xf32>
    %136 = tpu.reciprocal %135 {approx = true} : vector<1x8x1xf32> -> vector<1x8x1xf32>
    %137 = vector.broadcast %136 : vector<1x8x1xf32> to vector<1x8x8xf32>
    %138 = arith.mulf %133, %137 : vector<1x8x8xf32>
    %139 = arith.truncf %138 : vector<1x8x8xf32> to vector<1x8x8xbf16>
    %140 = arith.truncf %125 : vector<1x8x8xf32> to vector<1x8x8xbf16>
    "tpu.trace_start"() <{level = 10 : i32, message = "bqk,bkd->bqd"}> : () -> ()
    %cst_41 = arith.constant dense<0.000000e+00> : vector<1x8x8xf32>
    %141 = tpu.matmul %139, %140, %cst_41 {dimension_numbers = #tpu.dot_dimension_numbers<[2], [1], [1], [2], [0, 0, 0, 1, 1, 2], [0], [0]>} : vector<1x8x8xbf16>, vector<1x8x8xbf16>, vector<1x8x8xf32> -> vector<1x8x8xf32>
    "tpu.trace_stop"() : () -> ()
    %142 = vector.shape_cast %141 : vector<1x8x8xf32> to vector<8x8xf32>
    %143 = arith.truncf %142 : vector<8x8xf32> to vector<8x8xbf16>
    %144 = vector.extract_strided_slice %37 {offsets = [24, 0], sizes = [8, 32], strides = [1, 1]} : vector<32x32xbf16> to vector<8x32xbf16>
    %cst_42 = arith.constant dense<0.000000e+00> : vector<8x32xf32>
    %145 = tpu.matmul %143, %144, %cst_42 {dimension_numbers = #tpu.dot_dimension_numbers<[1], [0], [0], [1], [0, 0, 1, 1], [], []>} : vector<8x8xbf16>, vector<8x32xbf16>, vector<8x32xf32> -> vector<8x32xf32>
    %146 = arith.addf %119, %145 : vector<8x32xf32>
    %147 = arith.addf %3, %146 : vector<8x32xf32>
    %c0_43 = arith.constant 0 : index
    %c0_44 = arith.constant 0 : index
    %c0_45 = arith.constant 0 : index
    %148 = vector.load %arg6[%c0_43, %c0_44, %c0_45] : memref<1x1x32xf32, #tpu.memory_space<vmem>>, vector<1x1x32xf32>
    %149 = vector.shape_cast %148 : vector<1x1x32xf32> to vector<1x32xf32>
    %150 = vector.broadcast %149 : vector<1x32xf32> to vector<8x32xf32>
    %151 = arith.addf %147, %150 : vector<8x32xf32>
    %c0_46 = arith.constant 0 : index
    %c0_47 = arith.constant 0 : index
    %c0_48 = arith.constant 0 : index
    %152 = vector.load %arg9[%c0_46, %c0_47, %c0_48] : memref<1x1x32xf32, #tpu.memory_space<vmem>>, vector<1x1x32xf32>
    %153 = vector.shape_cast %152 : vector<1x1x32xf32> to vector<1x32xf32>
    %c0_49 = arith.constant 0 : index
    %c0_50 = arith.constant 0 : index
    %c0_51 = arith.constant 0 : index
    %154 = vector.load %arg10[%c0_49, %c0_50, %c0_51] : memref<1x1x32xf32, #tpu.memory_space<vmem>>, vector<1x1x32xf32>
    %155 = vector.shape_cast %154 : vector<1x1x32xf32> to vector<1x32xf32>
    %cst_52 = arith.constant dense<0.000000e+00> : vector<8xf32>
    %156 = vector.multi_reduction <add>, %151, %cst_52 [1] : vector<8x32xf32> to vector<8xf32>
    %157 = vector.shape_cast %156 : vector<8xf32> to vector<8x1xf32>
    %cst_53 = arith.constant 3.200000e+01 : f32
    %158 = vector.broadcast %cst_53 : f32 to vector<8x1xf32>
    %159 = arith.divf %157, %158 : vector<8x1xf32>
    %160 = vector.broadcast %159 : vector<8x1xf32> to vector<8x32xf32>
    %161 = arith.subf %151, %160 : vector<8x32xf32>
    %162 = arith.mulf %161, %161 : vector<8x32xf32>
    %cst_54 = arith.constant dense<0.000000e+00> : vector<8xf32>
    %163 = vector.multi_reduction <add>, %162, %cst_54 [1] : vector<8x32xf32> to vector<8xf32>
    %164 = vector.shape_cast %163 : vector<8xf32> to vector<8x1xf32>
    %cst_55 = arith.constant 3.200000e+01 : f32
    %165 = vector.broadcast %cst_55 : f32 to vector<8x1xf32>
    %166 = arith.divf %164, %165 : vector<8x1xf32>
    %cst_56 = arith.constant 9.99999974E-6 : f32
    %167 = vector.broadcast %cst_56 : f32 to vector<8x1xf32>
    %168 = arith.addf %166, %167 : vector<8x1xf32>
    %169 = math.rsqrt %168 : vector<8x1xf32>
    %170 = vector.broadcast %169 : vector<8x1xf32> to vector<8x32xf32>
    %171 = arith.mulf %161, %170 : vector<8x32xf32>
    %172 = vector.broadcast %153 : vector<1x32xf32> to vector<8x32xf32>
    %173 = arith.mulf %171, %172 : vector<8x32xf32>
    %174 = vector.broadcast %155 : vector<1x32xf32> to vector<8x32xf32>
    %175 = arith.addf %173, %174 : vector<8x32xf32>
    %176 = arith.truncf %175 : vector<8x32xf32> to vector<8x32xbf16>
    %c0_57 = arith.constant 0 : index
    %c0_58 = arith.constant 0 : index
    %c0_59 = arith.constant 0 : index
    %177 = vector.load %arg11[%c0_57, %c0_58, %c0_59] : memref<1x32x64xbf16, #tpu.memory_space<vmem>>, vector<1x32x64xbf16>
    %178 = vector.shape_cast %177 : vector<1x32x64xbf16> to vector<32x64xbf16>
    %cst_60 = arith.constant dense<0.000000e+00> : vector<8x64xf32>
    %179 = tpu.matmul %176, %178, %cst_60 {dimension_numbers = #tpu.dot_dimension_numbers<[1], [0], [0], [1], [0, 0, 1, 1], [], []>} : vector<8x32xbf16>, vector<32x64xbf16>, vector<8x64xf32> -> vector<8x64xf32>
    %c0_61 = arith.constant 0 : index
    %c0_62 = arith.constant 0 : index
    %c0_63 = arith.constant 0 : index
    %180 = vector.load %arg12[%c0_61, %c0_62, %c0_63] : memref<1x1x64xf32, #tpu.memory_space<vmem>>, vector<1x1x64xf32>
    %181 = vector.shape_cast %180 : vector<1x1x64xf32> to vector<1x64xf32>
    %182 = vector.broadcast %181 : vector<1x64xf32> to vector<8x64xf32>
    %183 = arith.addf %179, %182 : vector<8x64xf32>
    %cst_64 = arith.constant 0.000000e+00 : f32
    %184 = vector.broadcast %cst_64 : f32 to vector<8x64xf32>
    %185 = arith.maximumf %183, %184 : vector<8x64xf32>
    %186 = arith.truncf %185 : vector<8x64xf32> to vector<8x64xbf16>
    %c0_65 = arith.constant 0 : index
    %c0_66 = arith.constant 0 : index
    %c0_67 = arith.constant 0 : index
    %187 = vector.load %arg13[%c0_65, %c0_66, %c0_67] : memref<1x64x32xbf16, #tpu.memory_space<vmem>>, vector<1x64x32xbf16>
    %188 = vector.shape_cast %187 : vector<1x64x32xbf16> to vector<64x32xbf16>
    %cst_68 = arith.constant dense<0.000000e+00> : vector<8x32xf32>
    %189 = tpu.matmul %186, %188, %cst_68 {dimension_numbers = #tpu.dot_dimension_numbers<[1], [0], [0], [1], [0, 0, 1, 1], [], []>} : vector<8x64xbf16>, vector<64x32xbf16>, vector<8x32xf32> -> vector<8x32xf32>
    %c0_69 = arith.constant 0 : index
    %c0_70 = arith.constant 0 : index
    %c0_71 = arith.constant 0 : index
    %190 = vector.load %arg14[%c0_69, %c0_70, %c0_71] : memref<1x1x32xf32, #tpu.memory_space<vmem>>, vector<1x1x32xf32>
    %191 = vector.shape_cast %190 : vector<1x1x32xf32> to vector<1x32xf32>
    %192 = vector.broadcast %191 : vector<1x32xf32> to vector<8x32xf32>
    %193 = arith.addf %189, %192 : vector<8x32xf32>
    %194 = arith.addf %151, %193 : vector<8x32xf32>
    %c0_72 = arith.constant 0 : index
    %c0_73 = arith.constant 0 : index
    %195 = vector.load %arg21[%c0_72, %c0_73] : memref<8x32xf32, #tpu.memory_space<vmem>>, vector<8x32xf32>
    tpu.vector_store %arg21[%c0_72, %c0_73], %194 {strides = array<i32>} : memref<8x32xf32, #tpu.memory_space<vmem>>, vector<8x32xf32>,
    %c1_i32 = arith.constant 1 : i32
    %196 = arith.cmpi eq, %arg1, %c1_i32 : i32
    %197 = arith.extui %196 : i1 to i32
    %c0_i32_74 = arith.constant 0 : i32
    %198 = arith.cmpi ne, %197, %c0_i32_74 : i32
    scf.if %198 {
      %199 = vector.shape_cast %194 : vector<8x32xf32> to vector<1x8x32xf32>
      %c0_75 = arith.constant 0 : index
      %c0_76 = arith.constant 0 : index
      %200 = vector.load %arg15[%c0_75, %c0_76] : memref<1x32xf32, #tpu.memory_space<vmem>>, vector<1x32xf32>
      %201 = vector.shape_cast %200 : vector<1x32xf32> to vector<1x1x32xf32>
      %202 = vector.broadcast %201 : vector<1x1x32xf32> to vector<1x8x32xf32>
      %203 = arith.mulf %199, %202 : vector<1x8x32xf32>
      %cst_77 = arith.constant dense<0.000000e+00> : vector<1x8xf32>
      %204 = vector.multi_reduction <add>, %203, %cst_77 [2] : vector<1x8x32xf32> to vector<1x8xf32>
      %205 = vector.shape_cast %204 : vector<1x8xf32> to vector<1x8x1xf32>
      %cst_78 = arith.constant dense<0xFF800000> : vector<1x1xf32>
      %206 = vector.multi_reduction <maximumf>, %205, %cst_78 [1] : vector<1x8x1xf32> to vector<1x1xf32>
      %207 = vector.shape_cast %206 : vector<1x1xf32> to vector<1x1x1xf32>
      %208 = vector.broadcast %207 : vector<1x1x1xf32> to vector<1x8x1xf32>
      %209 = arith.subf %205, %208 : vector<1x8x1xf32>
      %210 = math.exp %209 : vector<1x8x1xf32>
      %cst_79 = arith.constant dense<0.000000e+00> : vector<1x1xf32>
      %211 = vector.multi_reduction <add>, %210, %cst_79 [1] : vector<1x8x1xf32> to vector<1x1xf32>
      %212 = vector.shape_cast %211 : vector<1x1xf32> to vector<1x1x1xf32>
      %213 = tpu.reciprocal %212 {approx = true} : vector<1x1x1xf32> -> vector<1x1x1xf32>
      %214 = vector.broadcast %213 : vector<1x1x1xf32> to vector<1x8x1xf32>
      %215 = arith.mulf %210, %214 : vector<1x8x1xf32>
      %216 = vector.broadcast %215 : vector<1x8x1xf32> to vector<1x8x32xf32>
      %217 = arith.mulf %199, %216 : vector<1x8x32xf32>
      %cst_80 = arith.constant dense<0.000000e+00> : vector<1x32xf32>
      %218 = vector.multi_reduction <add>, %217, %cst_80 [1] : vector<1x8x32xf32> to vector<1x32xf32>
      %219 = arith.truncf %218 : vector<1x32xf32> to vector<1x32xbf16>
      %c0_81 = arith.constant 0 : index
      %c0_82 = arith.constant 0 : index
      %220 = vector.load %arg16[%c0_81, %c0_82] : memref<32x32xbf16, #tpu.memory_space<vmem>>, vector<32x32xbf16>
      %cst_83 = arith.constant dense<0.000000e+00> : vector<1x32xf32>
      %221 = tpu.matmul %219, %220, %cst_83 {dimension_numbers = #tpu.dot_dimension_numbers<[1], [0], [0], [1], [0, 0, 1, 1], [], []>} : vector<1x32xbf16>, vector<32x32xbf16>, vector<1x32xf32> -> vector<1x32xf32>
      %c0_84 = arith.constant 0 : index
      %c0_85 = arith.constant 0 : index
      %222 = vector.load %arg17[%c0_84, %c0_85] : memref<1x32xf32, #tpu.memory_space<vmem>>, vector<1x32xf32>
      %223 = vector.shape_cast %222 : vector<1x32xf32> to vector<32xf32>
      %224 = vector.shape_cast %223 : vector<32xf32> to vector<1x32xf32>
      %225 = arith.addf %221, %224 : vector<1x32xf32>
      %cst_86 = arith.constant 0.000000e+00 : f32
      %226 = vector.broadcast %cst_86 : f32 to vector<1x32xf32>
      %227 = arith.maximumf %225, %226 : vector<1x32xf32>
      %228 = arith.truncf %227 : vector<1x32xf32> to vector<1x32xbf16>
      %c0_87 = arith.constant 0 : index
      %c0_88 = arith.constant 0 : index
      %229 = vector.load %arg18[%c0_87, %c0_88] : memref<32x128xbf16, #tpu.memory_space<vmem>>, vector<32x128xbf16>
      %cst_89 = arith.constant dense<0.000000e+00> : vector<1x128xf32>
      %230 = tpu.matmul %228, %229, %cst_89 {dimension_numbers = #tpu.dot_dimension_numbers<[1], [0], [0], [1], [0, 0, 1, 1], [], []>} : vector<1x32xbf16>, vector<32x128xbf16>, vector<1x128xf32> -> vector<1x128xf32>
      %c0_90 = arith.constant 0 : index
      %c0_91 = arith.constant 0 : index
      %231 = vector.load %arg19[%c0_90, %c0_91] : memref<1x128xf32, #tpu.memory_space<vmem>>, vector<1x128xf32>
      %232 = vector.shape_cast %231 : vector<1x128xf32> to vector<128xf32>
      %233 = vector.shape_cast %232 : vector<128xf32> to vector<1x128xf32>
      %234 = arith.addf %230, %233 : vector<1x128xf32>
      %c0_92 = arith.constant 0 : index
      %c0_93 = arith.constant 0 : index
      %c0_94 = arith.constant 0 : index
      %235 = vector.load %arg20[%c0_92, %c0_93, %c0_94] : memref<1x1x128xf32, #tpu.memory_space<vmem>>, vector<1x1x128xf32>
      %236 = vector.shape_cast %235 : vector<1x1x128xf32> to vector<1x128xf32>
      %237 = vector.shape_cast %234 : vector<1x128xf32> to vector<1x1x128xf32>
      tpu.vector_store %arg20[%c0_92, %c0_93, %c0_94], %237 {strides = array<i32>} : memref<1x1x128xf32, #tpu.memory_space<vmem>>, vector<1x1x128xf32>,
    } else {
    }
    return
  }
  func.func @transform_0(%arg0: i32, %arg1: i32) -> (i32, i32, i32) {
    %c0_i32 = arith.constant 0 : i32
    %c0_i32_0 = arith.constant 0 : i32
    %c0_i32_1 = arith.constant 0 : i32
    return %arg0, %c0_i32, %c0_i32_0 : i32, i32, i32
  }
  func.func @transform_1(%arg0: i32, %arg1: i32) -> (i32, i32, i32) {
    %c0_i32 = arith.constant 0 : i32
    %c0_i32_0 = arith.constant 0 : i32
    %c0_i32_1 = arith.constant 0 : i32
    return %arg1, %c0_i32, %c0_i32_0 : i32, i32, i32
  }
  func.func @transform_2(%arg0: i32, %arg1: i32) -> (i32, i32, i32) {
    %c0_i32 = arith.constant 0 : i32
    %c0_i32_0 = arith.constant 0 : i32
    %c0_i32_1 = arith.constant 0 : i32
    return %arg1, %c0_i32, %c0_i32_0 : i32, i32, i32
  }
  func.func @transform_3(%arg0: i32, %arg1: i32) -> (i32, i32, i32) {
    %c0_i32 = arith.constant 0 : i32
    %c0_i32_0 = arith.constant 0 : i32
    %c0_i32_1 = arith.constant 0 : i32
    return %arg1, %c0_i32, %c0_i32_0 : i32, i32, i32
  }
  func.func @transform_4(%arg0: i32, %arg1: i32) -> (i32, i32, i32) {
    %c0_i32 = arith.constant 0 : i32
    %c0_i32_0 = arith.constant 0 : i32
    %c0_i32_1 = arith.constant 0 : i32
    return %arg1, %c0_i32, %c0_i32_0 : i32, i32, i32
  }
  func.func @transform_5(%arg0: i32, %arg1: i32) -> (i32, i32, i32) {
    %c0_i32 = arith.constant 0 : i32
    %c0_i32_0 = arith.constant 0 : i32
    %c0_i32_1 = arith.constant 0 : i32
    return %arg1, %c0_i32, %c0_i32_0 : i32, i32, i32
  }
  func.func @transform_6(%arg0: i32, %arg1: i32) -> (i32, i32, i32) {
    %c0_i32 = arith.constant 0 : i32
    %c0_i32_0 = arith.constant 0 : i32
    %c0_i32_1 = arith.constant 0 : i32
    return %arg1, %c0_i32, %c0_i32_0 : i32, i32, i32
  }
  func.func @transform_7(%arg0: i32, %arg1: i32) -> (i32, i32, i32) {
    %c0_i32 = arith.constant 0 : i32
    %c0_i32_0 = arith.constant 0 : i32
    %c0_i32_1 = arith.constant 0 : i32
    return %arg1, %c0_i32, %c0_i32_0 : i32, i32, i32
  }
  func.func @transform_8(%arg0: i32, %arg1: i32) -> (i32, i32, i32) {
    %c0_i32 = arith.constant 0 : i32
    %c0_i32_0 = arith.constant 0 : i32
    %c0_i32_1 = arith.constant 0 : i32
    return %arg1, %c0_i32, %c0_i32_0 : i32, i32, i32
  }
  func.func @transform_9(%arg0: i32, %arg1: i32) -> (i32, i32, i32) {
    %c0_i32 = arith.constant 0 : i32
    %c0_i32_0 = arith.constant 0 : i32
    %c0_i32_1 = arith.constant 0 : i32
    return %arg1, %c0_i32, %c0_i32_0 : i32, i32, i32
  }
  func.func @transform_10(%arg0: i32, %arg1: i32) -> (i32, i32, i32) {
    %c0_i32 = arith.constant 0 : i32
    %c0_i32_0 = arith.constant 0 : i32
    %c0_i32_1 = arith.constant 0 : i32
    return %arg1, %c0_i32, %c0_i32_0 : i32, i32, i32
  }
  func.func @transform_11(%arg0: i32, %arg1: i32) -> (i32, i32, i32) {
    %c0_i32 = arith.constant 0 : i32
    %c0_i32_0 = arith.constant 0 : i32
    %c0_i32_1 = arith.constant 0 : i32
    return %arg1, %c0_i32, %c0_i32_0 : i32, i32, i32
  }
  func.func @transform_12(%arg0: i32, %arg1: i32) -> (i32, i32, i32) {
    %c0_i32 = arith.constant 0 : i32
    %c0_i32_0 = arith.constant 0 : i32
    %c0_i32_1 = arith.constant 0 : i32
    return %arg1, %c0_i32, %c0_i32_0 : i32, i32, i32
  }
  func.func @transform_13(%arg0: i32, %arg1: i32) -> (i32, i32) {
    %c0_i32 = arith.constant 0 : i32
    %c0_i32_0 = arith.constant 0 : i32
    %c0_i32_1 = arith.constant 0 : i32
    return %c0_i32, %c0_i32_0 : i32, i32
  }
  func.func @transform_14(%arg0: i32, %arg1: i32) -> (i32, i32) {
    %c0_i32 = arith.constant 0 : i32
    %c0_i32_0 = arith.constant 0 : i32
    %c0_i32_1 = arith.constant 0 : i32
    return %c0_i32, %c0_i32_0 : i32, i32
  }
  func.func @transform_15(%arg0: i32, %arg1: i32) -> (i32, i32) {
    %c0_i32 = arith.constant 0 : i32
    %c0_i32_0 = arith.constant 0 : i32
    %c0_i32_1 = arith.constant 0 : i32
    return %c0_i32, %c0_i32_0 : i32, i32
  }
  func.func @transform_16(%arg0: i32, %arg1: i32) -> (i32, i32) {
    %c0_i32 = arith.constant 0 : i32
    %c0_i32_0 = arith.constant 0 : i32
    %c0_i32_1 = arith.constant 0 : i32
    return %c0_i32, %c0_i32_0 : i32, i32
  }
  func.func @transform_17(%arg0: i32, %arg1: i32) -> (i32, i32) {
    %c0_i32 = arith.constant 0 : i32
    %c0_i32_0 = arith.constant 0 : i32
    %c0_i32_1 = arith.constant 0 : i32
    return %c0_i32, %c0_i32_0 : i32, i32
  }
  func.func @transform_18(%arg0: i32, %arg1: i32) -> (i32, i32, i32) {
    %c0_i32 = arith.constant 0 : i32
    %c0_i32_0 = arith.constant 0 : i32
    %c0_i32_1 = arith.constant 0 : i32
    return %arg0, %c0_i32, %c0_i32_0 : i32, i32, i32
  }
}

</mosaic_0001>

<llo_original>
// kernel: tpu_custom_call.1
$region0: #{tpu_custom_call.1}
  #allocation0 [shape = 'u32[]', space=smem, size = 0x4, offset = 0x4, fixed_abs, tag = 'smem constant byte address 0x4 - core index']
  #allocation1 [shape = 'u32[144,128]{1,0:T(1,128)}', space=vmem, size = 0x12000, scoped, tag = 'internal scratch']
  #allocation2 [shape = 'f32[8,32]{1,0:T(8,128)}', space=vmem, size = 0x1000, scoped, tag = 'scratch operand']
  %s0 = inlined_call_operand.hbm [shape: f32[2,8,32], index: 0, kind: input, shape index: {}]
  %s1 = inlined_call_operand.vmem [shape: bf16[2,32,96], index: 1, kind: input, shape index: {}]
  %s2 = inlined_call_operand.hbm [shape: f32[2,1,96], index: 2, kind: input, shape index: {}]
  %s3 = inlined_call_operand.vmem [shape: bf16[2,32,32], index: 3, kind: input, shape index: {}]
  %s4 = inlined_call_operand.hbm [shape: f32[2,1,32], index: 4, kind: input, shape index: {}]
  %s5 = inlined_call_operand.hbm [shape: f32[2,1,32], index: 5, kind: input, shape index: {}]
  %s6 = inlined_call_operand.hbm [shape: f32[2,1,32], index: 6, kind: input, shape index: {}]
  %s7 = inlined_call_operand.hbm [shape: f32[2,1,32], index: 7, kind: input, shape index: {}]
  %s8 = inlined_call_operand.hbm [shape: f32[2,1,32], index: 8, kind: input, shape index: {}]
  %s9 = inlined_call_operand.vmem [shape: bf16[2,32,64], index: 9, kind: input, shape index: {}]
  %s10 = inlined_call_operand.hbm [shape: f32[2,1,64], index: 10, kind: input, shape index: {}]
  %s11 = inlined_call_operand.vmem [shape: bf16[2,64,32], index: 11, kind: input, shape index: {}]
  %s12 = inlined_call_operand.hbm [shape: f32[2,1,32], index: 12, kind: input, shape index: {}]
  %s13 = inlined_call_operand.vmem [shape: f32[1,32], index: 13, kind: input, shape index: {}]
  %s14 = inlined_call_operand.vmem [shape: bf16[32,32], index: 14, kind: input, shape index: {}]
  %s15 = inlined_call_operand.vmem [shape: f32[1,32], index: 15, kind: input, shape index: {}]
  %s16 = inlined_call_operand.hbm [shape: bf16[32,128], index: 16, kind: input, shape index: {}]
  %s17 = inlined_call_operand.vmem [shape: f32[1,128], index: 17, kind: input, shape index: {}]
  %s18 = inlined_call_operand.hbm [shape: f32[2,1,128], index: 18, kind: output, shape index: {}]
  %s19 = sld [smem:[#allocation0]]
  $region153: #{tpu_custom_call.1} parent=0
    _
  %s21 = ssub.s32 1, %s19
  %s22 = scalar_select 0, %s21, %s19
  $region1: #{tpu_custom_call.1} parent=0
    #allocation3 [shape = 'u8[8192]{0}', space=vmem, size = 0x2000, scoped, tag = 'input window, operand 0']
    #allocation4 [shape = 's32[2]{0}', space=sflag, size = 0x8, scoped, tag = 'scoped memory for tpu_custom_call.1']
    #allocation5 [shape = 's32[2]{0}', space=sflag, size = 0x8, scoped, tag = 'scoped memory for tpu_custom_call.1']
    #allocation6 [shape = 'u8[1024]{0}', space=vmem, size = 0x400, scoped, tag = 'input window, operand 2']
    #allocation7 [shape = 's32[2]{0}', space=sflag, size = 0x8, scoped, tag = 'scoped memory for tpu_custom_call.1']
    #allocation8 [shape = 'u8[1024]{0}', space=vmem, size = 0x400, scoped, tag = 'input window, operand 4']
    #allocation9 [shape = 'u8[1024]{0}', space=vmem, size = 0x400, scoped, tag = 'input window, operand 5']
    #allocation10 [shape = 's32[2]{0}', space=sflag, size = 0x8, scoped, tag = 'scoped memory for tpu_custom_call.1']
    #allocation11 [shape = 'u8[1024]{0}', space=vmem, size = 0x400, scoped, tag = 'input window, operand 6']
    #allocation12 [shape = 'u8[1024]{0}', space=vmem, size = 0x400, scoped, tag = 'input window, operand 7']
    #allocation13 [shape = 's32[2]{0}', space=sflag, size = 0x8, scoped, tag = 'scoped memory for tpu_custom_call.1']
    #allocation14 [shape = 'u8[1024]{0}', space=vmem, size = 0x400, scoped, tag = 'input window, operand 8']
    #allocation15 [shape = 'u8[1024]{0}', space=vmem, size = 0x400, scoped, tag = 'input window, operand 10']
    #allocation16 [shape = 's32[2]{0}', space=sflag, size = 0x8, scoped, tag = 'scoped memory for tpu_custom_call.1']
    #allocation17 [shape = 'u8[1024]{0}', space=vmem, size = 0x400, scoped, tag = 'input window, operand 12']
    #allocation18 [shape = 'u8[8192]{0}', space=vmem, size = 0x2000, scoped, tag = 'input window, operand 16, single buffered']
    #allocation19 [shape = 's32[1]{0}', space=sflag, size = 0x4, scoped, tag = 'scoped memory for tpu_custom_call.1']
    #allocation20 [shape = 'u8[1024]{0}', space=vmem, size = 0x400, scoped, tag = 'output window, operand 0']
    %23 = vsyncpa [#allocation4], 0
    %s24 = scalar_lea.sflag [#allocation4], 1
    %25 = vsyncpa %s24, 0
    %26 = vsyncpa [#allocation7], 0
    %s27 = scalar_lea.sflag [#allocation7], 1
    %28 = vsyncpa %s27, 0
    %29 = vsyncpa [#allocation10], 0
    %s30 = scalar_lea.sflag [#allocation10], 1
    %31 = vsyncpa %s30, 0
    %32 = vsyncpa [#allocation13], 0
    %s33 = scalar_lea.sflag [#allocation13], 1
    %34 = vsyncpa %s33, 0
    %35 = vsyncpa [#allocation16], 0
    %s36 = scalar_lea.sflag [#allocation16], 1
    %37 = vsyncpa %s36, 0
    %38 = vsyncpa [#allocation19], 0
    %39 = vsyncpa [#allocation5], 0
    %s40 = scalar_lea.sflag [#allocation5], 1
    %41 = vsyncpa %s40, 0
    loop: start=0, step=1, limit=6
    $region2: #{tpu_custom_call.1} parent=1 // loop_pre_header
      _
    $region3: #{tpu_custom_call.1} parent=1 // loop_header
      %s43 = sphi 0, %s47
      %p44 = scmp.ge.s32.totalorder %s43, 6
      %s50 = sphi 0, %s62
      %s51 = sphi 0, %s58
      %s52 = sphi 0, %s50
      %s53 = sphi 0, %s51
      %s54 = sphi 0, %s52
      %s55 = sphi 0, %s53
      %s65 = sphi 0, %s67
      %s68 = sphi 0, %s65
      %s69 = sphi 0, %s68
      %s85 = sphi 0, %s69
      %s91 = sphi 0, %s93
      %s94 = sphi 0, %s91
      %s95 = sphi 0, %s94
      %s111 = sphi 0, %s95
      %s117 = sphi 0, %s119
      %s120 = sphi 0, %s117
      %s121 = sphi 0, %s120
      %s137 = sphi 0, %s121
      %s143 = sphi 0, %s145
      %s146 = sphi 0, %s143
      %s147 = sphi 0, %s146
      %s163 = sphi 0, %s147
      %s169 = sphi 0, %s171
      %s172 = sphi 0, %s169
      %s173 = sphi 0, %s172
      %s189 = sphi 0, %s173
      %s195 = sphi 0, %s197
      %s198 = sphi 0, %s195
      %s199 = sphi 0, %s198
      %s215 = sphi 0, %s199
      %s221 = sphi 0, %s223
      %s224 = sphi 0, %s221
      %s225 = sphi 0, %s224
      %s241 = sphi 0, %s225
      %s247 = sphi 0, %s249
      %s250 = sphi 0, %s247
      %s251 = sphi 0, %s250
      %s267 = sphi 0, %s251
      %s273 = sphi 0, %s275
      %s276 = sphi 0, %s273
      %s277 = sphi 0, %s276
      %s293 = sphi 0, %s277
      %s299 = sphi 0, %s301
      %s302 = sphi 0, %s299
      %s303 = sphi 0, %s302
      %s319 = sphi 0, %s303
      %s325 = sphi 0, %s327
      %s328 = sphi 0, %s325
      %s329 = sphi 0, %s328
      %s345 = sphi 0, %s329
      %s351 = sphi 0, %s353
      %s354 = sphi 0, %s351
      %s355 = sphi 0, %s354
      %s371 = sphi 0, %s355
      %s377 = sphi 0, %s379
      %s380 = sphi 0, %s377
      %s381 = sphi 0, %s380
      %s397 = sphi 0, %s381
      %s401 = sphi 0, %s401
      %s403 = sphi 0, %s401
      %s404 = sphi 0, %s403
      %s418 = sphi 0, %s404
      %s422 = sphi 0, %s422
      %s424 = sphi 0, %s422
      %s425 = sphi 0, %s424
      %s439 = sphi 0, %s425
      %s443 = sphi 0, %s443
      %s445 = sphi 0, %s443
      %s446 = sphi 0, %s445
      %s460 = sphi 0, %s446
      %s464 = sphi 0, %s464
      %s466 = sphi 0, %s464
      %s467 = sphi 0, %s466
      %s481 = sphi 0, %s467
      %s485 = sphi 0, %s485
      %s487 = sphi 0, %s485
      %s488 = sphi 0, %s487
      %s502 = sphi 0, %s488
      %s508 = sphi 0, %s510
      %s511 = sphi 0, %s508
      %s512 = sphi 0, %s511
      %s528 = sphi 0, %s512
    $region4: #{tpu_custom_call.1} parent=1 // loop_header_branch
      %46 = sbr.rel (%p44) target = $region8
    $region5: #{tpu_custom_call.1} parent=1 // loop_body
      %s48 = ssub.s32 %s43, 1
      %s49 = ssub.s32 %s43, 2
      %s56 = sadd.s32 1, %s51
      %p57 = scmp.ge.s32.totalorder %s56, 2
      %s58 = scalar_select %p57, 0, %s56
      %s59 = sadd.s32 1, %s50
      %s60 = scalar_select %p57, %s59, %s50
      %p61 = scmp.ge.s32.totalorder %s60, 2
      %s62 = scalar_select %p61, 0, %s60
      %s63 = ssub.s32 %s50, %s62
      %p64 = scmp.eq.s32.totalorder %s63, 0
      %s66 = sadd.s32 %s65, 1
      %s67 = scalar_select %p64, %s65, %s66
      %p70 = pneg %p64
      %p71 = scmp.eq.s32.totalorder %s43, 3
      %p72 = por %p70, %p71
      %p73 = scmp.ne.s32.totalorder %s65, %s68
      %p74 = scmp.eq.s32.totalorder %s43, 0
      %p75 = por %p73, %p74
      %p76 = scmp.ne.s32.totalorder %s65, %s68
      %p77 = scmp.eq.s32.totalorder %s48, 3
      %p78 = por %p76, %p77
      %p79 = scmp.ne.s32.totalorder %s68, %s69
      %p80 = scmp.eq.s32.totalorder %s48, 0
      %p81 = por %p79, %p80
      %p82 = scmp.ne.s32.totalorder %s68, %s69
      %p83 = scmp.eq.s32.totalorder %s49, 3
      %p84 = por %p82, %p83
      %p86 = scmp.ne.s32.totalorder %s69, %s85
      %p87 = scmp.eq.s32.totalorder %s49, 0
      %p88 = por %p86, %p87
      %s89 = ssub.s32 %s51, %s58
      %p90 = scmp.eq.s32.totalorder %s89, 0
      %s92 = sadd.s32 %s91, 1
      %s93 = scalar_select %p90, %s91, %s92
      %p96 = pneg %p90
      %p97 = scmp.eq.s32.totalorder %s43, 3
      %p98 = por %p96, %p97
      %p99 = scmp.ne.s32.totalorder %s91, %s94
      %p100 = scmp.eq.s32.totalorder %s43, 0
      %p101 = por %p99, %p100
      %p102 = scmp.ne.s32.totalorder %s91, %s94
      %p103 = scmp.eq.s32.totalorder %s48, 3
      %p104 = por %p102, %p103
      %p105 = scmp.ne.s32.totalorder %s94, %s95
      %p106 = scmp.eq.s32.totalorder %s48, 0
      %p107 = por %p105, %p106
      %p108 = scmp.ne.s32.totalorder %s94, %s95
      %p109 = scmp.eq.s32.totalorder %s49, 3
      %p110 = por %p108, %p109
      %p112 = scmp.ne.s32.totalorder %s95, %s111
      %p113 = scmp.eq.s32.totalorder %s49, 0
      %p114 = por %p112, %p113
      %s115 = ssub.s32 %s51, %s58
      %p116 = scmp.eq.s32.totalorder %s115, 0
      %s118 = sadd.s32 %s117, 1
      %s119 = scalar_select %p116, %s117, %s118
      %p122 = pneg %p116
      %p123 = scmp.eq.s32.totalorder %s43, 3
      %p124 = por %p122, %p123
      %p125 = scmp.ne.s32.totalorder %s117, %s120
      %p126 = scmp.eq.s32.totalorder %s43, 0
      %p127 = por %p125, %p126
      %p128 = scmp.ne.s32.totalorder %s117, %s120
      %p129 = scmp.eq.s32.totalorder %s48, 3
      %p130 = por %p128, %p129
      %p131 = scmp.ne.s32.totalorder %s120, %s121
      %p132 = scmp.eq.s32.totalorder %s48, 0
      %p133 = por %p131, %p132
      %p134 = scmp.ne.s32.totalorder %s120, %s121
      %p135 = scmp.eq.s32.totalorder %s49, 3
      %p136 = por %p134, %p135
      %p138 = scmp.ne.s32.totalorder %s121, %s137
      %p139 = scmp.eq.s32.totalorder %s49, 0
      %p140 = por %p138, %p139
      %s141 = ssub.s32 %s51, %s58
      %p142 = scmp.eq.s32.totalorder %s141, 0
      %s144 = sadd.s32 %s143, 1
      %s145 = scalar_select %p142, %s143, %s144
      %p148 = pneg %p142
      %p149 = scmp.eq.s32.totalorder %s43, 3
      %p150 = por %p148, %p149
      %p151 = scmp.ne.s32.totalorder %s143, %s146
      %p152 = scmp.eq.s32.totalorder %s43, 0
      %p153 = por %p151, %p152
      %p154 = scmp.ne.s32.totalorder %s143, %s146
      %p155 = scmp.eq.s32.totalorder %s48, 3
      %p156 = por %p154, %p155
      %p157 = scmp.ne.s32.totalorder %s146, %s147
      %p158 = scmp.eq.s32.totalorder %s48, 0
      %p159 = por %p157, %p158
      %p160 = scmp.ne.s32.totalorder %s146, %s147
      %p161 = scmp.eq.s32.totalorder %s49, 3
      %p162 = por %p160, %p161
      %p164 = scmp.ne.s32.totalorder %s147, %s163
      %p165 = scmp.eq.s32.totalorder %s49, 0
      %p166 = por %p164, %p165
      %s167 = ssub.s32 %s51, %s58
      %p168 = scmp.eq.s32.totalorder %s167, 0
      %s170 = sadd.s32 %s169, 1
      %s171 = scalar_select %p168, %s169, %s170
      %p174 = pneg %p168
      %p175 = scmp.eq.s32.totalorder %s43, 3
      %p176 = por %p174, %p175
      %p177 = scmp.ne.s32.totalorder %s169, %s172
      %p178 = scmp.eq.s32.totalorder %s43, 0
      %p179 = por %p177, %p178
      %p180 = scmp.ne.s32.totalorder %s169, %s172
      %p181 = scmp.eq.s32.totalorder %s48, 3
      %p182 = por %p180, %p181
      %p183 = scmp.ne.s32.totalorder %s172, %s173
      %p184 = scmp.eq.s32.totalorder %s48, 0
      %p185 = por %p183, %p184
      %p186 = scmp.ne.s32.totalorder %s172, %s173
      %p187 = scmp.eq.s32.totalorder %s49, 3
      %p188 = por %p186, %p187
      %p190 = scmp.ne.s32.totalorder %s173, %s189
      %p191 = scmp.eq.s32.totalorder %s49, 0
      %p192 = por %p190, %p191
      %s193 = ssub.s32 %s51, %s58
      %p194 = scmp.eq.s32.totalorder %s193, 0
      %s196 = sadd.s32 %s195, 1
      %s197 = scalar_select %p194, %s195, %s196
      %p200 = pneg %p194
      %p201 = scmp.eq.s32.totalorder %s43, 3
      %p202 = por %p200, %p201
      %p203 = scmp.ne.s32.totalorder %s195, %s198
      %p204 = scmp.eq.s32.totalorder %s43, 0
      %p205 = por %p203, %p204
      %p206 = scmp.ne.s32.totalorder %s195, %s198
      %p207 = scmp.eq.s32.totalorder %s48, 3
      %p208 = por %p206, %p207
      %p209 = scmp.ne.s32.totalorder %s198, %s199
      %p210 = scmp.eq.s32.totalorder %s48, 0
      %p211 = por %p209, %p210
      %p212 = scmp.ne.s32.totalorder %s198, %s199
      %p213 = scmp.eq.s32.totalorder %s49, 3
      %p214 = por %p212, %p213
      %p216 = scmp.ne.s32.totalorder %s199, %s215
      %p217 = scmp.eq.s32.totalorder %s49, 0
      %p218 = por %p216, %p217
      %s219 = ssub.s32 %s51, %s58
      %p220 = scmp.eq.s32.totalorder %s219, 0
      %s222 = sadd.s32 %s221, 1
      %s223 = scalar_select %p220, %s221, %s222
      %p226 = pneg %p220
      %p227 = scmp.eq.s32.totalorder %s43, 3
      %p228 = por %p226, %p227
      %p229 = scmp.ne.s32.totalorder %s221, %s224
      %p230 = scmp.eq.s32.totalorder %s43, 0
      %p231 = por %p229, %p230
      %p232 = scmp.ne.s32.totalorder %s221, %s224
      %p233 = scmp.eq.s32.totalorder %s48, 3
      %p234 = por %p232, %p233
      %p235 = scmp.ne.s32.totalorder %s224, %s225
      %p236 = scmp.eq.s32.totalorder %s48, 0
      %p237 = por %p235, %p236
      %p238 = scmp.ne.s32.totalorder %s224, %s225
      %p239 = scmp.eq.s32.totalorder %s49, 3
      %p240 = por %p238, %p239
      %p242 = scmp.ne.s32.totalorder %s225, %s241
      %p243 = scmp.eq.s32.totalorder %s49, 0
      %p244 = por %p242, %p243
      %s245 = ssub.s32 %s51, %s58
      %p246 = scmp.eq.s32.totalorder %s245, 0
      %s248 = sadd.s32 %s247, 1
      %s249 = scalar_select %p246, %s247, %s248
      %p252 = pneg %p246
      %p253 = scmp.eq.s32.totalorder %s43, 3
      %p254 = por %p252, %p253
      %p255 = scmp.ne.s32.totalorder %s247, %s250
      %p256 = scmp.eq.s32.totalorder %s43, 0
      %p257 = por %p255, %p256
      %p258 = scmp.ne.s32.totalorder %s247, %s250
      %p259 = scmp.eq.s32.totalorder %s48, 3
      %p260 = por %p258, %p259
      %p261 = scmp.ne.s32.totalorder %s250, %s251
      %p262 = scmp.eq.s32.totalorder %s48, 0
      %p263 = por %p261, %p262
      %p264 = scmp.ne.s32.totalorder %s250, %s251
      %p265 = scmp.eq.s32.totalorder %s49, 3
      %p266 = por %p264, %p265
      %p268 = scmp.ne.s32.totalorder %s251, %s267
      %p269 = scmp.eq.s32.totalorder %s49, 0
      %p270 = por %p268, %p269
      %s271 = ssub.s32 %s51, %s58
      %p272 = scmp.eq.s32.totalorder %s271, 0
      %s274 = sadd.s32 %s273, 1
      %s275 = scalar_select %p272, %s273, %s274
      %p278 = pneg %p272
      %p279 = scmp.eq.s32.totalorder %s43, 3
      %p280 = por %p278, %p279
      %p281 = scmp.ne.s32.totalorder %s273, %s276
      %p282 = scmp.eq.s32.totalorder %s43, 0
      %p283 = por %p281, %p282
      %p284 = scmp.ne.s32.totalorder %s273, %s276
      %p285 = scmp.eq.s32.totalorder %s48, 3
      %p286 = por %p284, %p285
      %p287 = scmp.ne.s32.totalorder %s276, %s277
      %p288 = scmp.eq.s32.totalorder %s48, 0
      %p289 = por %p287, %p288
      %p290 = scmp.ne.s32.totalorder %s276, %s277
      %p291 = scmp.eq.s32.totalorder %s49, 3
      %p292 = por %p290, %p291
      %p294 = scmp.ne.s32.totalorder %s277, %s293
      %p295 = scmp.eq.s32.totalorder %s49, 0
      %p296 = por %p294, %p295
      %s297 = ssub.s32 %s51, %s58
      %p298 = scmp.eq.s32.totalorder %s297, 0
      %s300 = sadd.s32 %s299, 1
      %s301 = scalar_select %p298, %s299, %s300
      %p304 = pneg %p298
      %p305 = scmp.eq.s32.totalorder %s43, 3
      %p306 = por %p304, %p305
      %p307 = scmp.ne.s32.totalorder %s299, %s302
      %p308 = scmp.eq.s32.totalorder %s43, 0
      %p309 = por %p307, %p308
      %p310 = scmp.ne.s32.totalorder %s299, %s302
      %p311 = scmp.eq.s32.totalorder %s48, 3
      %p312 = por %p310, %p311
      %p313 = scmp.ne.s32.totalorder %s302, %s303
      %p314 = scmp.eq.s32.totalorder %s48, 0
      %p315 = por %p313, %p314
      %p316 = scmp.ne.s32.totalorder %s302, %s303
      %p317 = scmp.eq.s32.totalorder %s49, 3
      %p318 = por %p316, %p317
      %p320 = scmp.ne.s32.totalorder %s303, %s319
      %p321 = scmp.eq.s32.totalorder %s49, 0
      %p322 = por %p320, %p321
      %s323 = ssub.s32 %s51, %s58
      %p324 = scmp.eq.s32.totalorder %s323, 0
      %s326 = sadd.s32 %s325, 1
      %s327 = scalar_select %p324, %s325, %s326
      %p330 = pneg %p324
      %p331 = scmp.eq.s32.totalorder %s43, 3
      %p332 = por %p330, %p331
      %p333 = scmp.ne.s32.totalorder %s325, %s328
      %p334 = scmp.eq.s32.totalorder %s43, 0
      %p335 = por %p333, %p334
      %p336 = scmp.ne.s32.totalorder %s325, %s328
      %p337 = scmp.eq.s32.totalorder %s48, 3
      %p338 = por %p336, %p337
      %p339 = scmp.ne.s32.totalorder %s328, %s329
      %p340 = scmp.eq.s32.totalorder %s48, 0
      %p341 = por %p339, %p340
      %p342 = scmp.ne.s32.totalorder %s328, %s329
      %p343 = scmp.eq.s32.totalorder %s49, 3
      %p344 = por %p342, %p343
      %p346 = scmp.ne.s32.totalorder %s329, %s345
      %p347 = scmp.eq.s32.totalorder %s49, 0
      %p348 = por %p346, %p347
      %s349 = ssub.s32 %s51, %s58
      %p350 = scmp.eq.s32.totalorder %s349, 0
      %s352 = sadd.s32 %s351, 1
      %s353 = scalar_select %p350, %s351, %s352
      %p356 = pneg %p350
      %p357 = scmp.eq.s32.totalorder %s43, 3
      %p358 = por %p356, %p357
      %p359 = scmp.ne.s32.totalorder %s351, %s354
      %p360 = scmp.eq.s32.totalorder %s43, 0
      %p361 = por %p359, %p360
      %p362 = scmp.ne.s32.totalorder %s351, %s354
      %p363 = scmp.eq.s32.totalorder %s48, 3
      %p364 = por %p362, %p363
      %p365 = scmp.ne.s32.totalorder %s354, %s355
      %p366 = scmp.eq.s32.totalorder %s48, 0
      %p367 = por %p365, %p366
      %p368 = scmp.ne.s32.totalorder %s354, %s355
      %p369 = scmp.eq.s32.totalorder %s49, 3
      %p370 = por %p368, %p369
      %p372 = scmp.ne.s32.totalorder %s355, %s371
      %p373 = scmp.eq.s32.totalorder %s49, 0
      %p374 = por %p372, %p373
      %s375 = ssub.s32 %s51, %s58
      %p376 = scmp.eq.s32.totalorder %s375, 0
      %s378 = sadd.s32 %s377, 1
      %s379 = scalar_select %p376, %s377, %s378
      %p382 = pneg %p376
      %p383 = scmp.eq.s32.totalorder %s43, 3
      %p384 = por %p382, %p383
      %p385 = scmp.ne.s32.totalorder %s377, %s380
      %p386 = scmp.eq.s32.totalorder %s43, 0
      %p387 = por %p385, %p386
      %p388 = scmp.ne.s32.totalorder %s377, %s380
      %p389 = scmp.eq.s32.totalorder %s48, 3
      %p390 = por %p388, %p389
      %p391 = scmp.ne.s32.totalorder %s380, %s381
      %p392 = scmp.eq.s32.totalorder %s48, 0
      %p393 = por %p391, %p392
      %p394 = scmp.ne.s32.totalorder %s380, %s381
      %p395 = scmp.eq.s32.totalorder %s49, 3
      %p396 = por %p394, %p395
      %p398 = scmp.ne.s32.totalorder %s381, %s397
      %p399 = scmp.eq.s32.totalorder %s49, 0
      %p400 = por %p398, %p399
      %s402 = sadd.s32 %s401, 1
      %p405 = scmp.eq.s32.totalorder %s43, 3
      %p406 = scmp.ne.s32.totalorder %s401, %s403
      %p407 = scmp.eq.s32.totalorder %s43, 0
      %p408 = por %p406, %p407
      %p409 = scmp.ne.s32.totalorder %s401, %s403
      %p410 = scmp.eq.s32.totalorder %s48, 3
      %p411 = por %p409, %p410
      %p412 = scmp.ne.s32.totalorder %s403, %s404
      %p413 = scmp.eq.s32.totalorder %s48, 0
      %p414 = por %p412, %p413
      %p415 = scmp.ne.s32.totalorder %s403, %s404
      %p416 = scmp.eq.s32.totalorder %s49, 3
      %p417 = por %p415, %p416
      %p419 = scmp.ne.s32.totalorder %s404, %s418
      %p420 = scmp.eq.s32.totalorder %s49, 0
      %p421 = por %p419, %p420
      %s423 = sadd.s32 %s422, 1
      %p426 = scmp.eq.s32.totalorder %s43, 3
      %p427 = scmp.ne.s32.totalorder %s422, %s424
      %p428 = scmp.eq.s32.totalorder %s43, 0
      %p429 = por %p427, %p428
      %p430 = scmp.ne.s32.totalorder %s422, %s424
      %p431 = scmp.eq.s32.totalorder %s48, 3
      %p432 = por %p430, %p431
      %p433 = scmp.ne.s32.totalorder %s424, %s425
      %p434 = scmp.eq.s32.totalorder %s48, 0
      %p435 = por %p433, %p434
      %p436 = scmp.ne.s32.totalorder %s424, %s425
      %p437 = scmp.eq.s32.totalorder %s49, 3
      %p438 = por %p436, %p437
      %p440 = scmp.ne.s32.totalorder %s425, %s439
      %p441 = scmp.eq.s32.totalorder %s49, 0
      %p442 = por %p440, %p441
      %s444 = sadd.s32 %s443, 1
      %p447 = scmp.eq.s32.totalorder %s43, 3
      %p448 = scmp.ne.s32.totalorder %s443, %s445
      %p449 = scmp.eq.s32.totalorder %s43, 0
      %p450 = por %p448, %p449
      %p451 = scmp.ne.s32.totalorder %s443, %s445
      %p452 = scmp.eq.s32.totalorder %s48, 3
      %p453 = por %p451, %p452
      %p454 = scmp.ne.s32.totalorder %s445, %s446
      %p455 = scmp.eq.s32.totalorder %s48, 0
      %p456 = por %p454, %p455
      %p457 = scmp.ne.s32.totalorder %s445, %s446
      %p458 = scmp.eq.s32.totalorder %s49, 3
      %p459 = por %p457, %p458
      %p461 = scmp.ne.s32.totalorder %s446, %s460
      %p462 = scmp.eq.s32.totalorder %s49, 0
      %p463 = por %p461, %p462
      %s465 = sadd.s32 %s464, 1
      %p468 = scmp.eq.s32.totalorder %s43, 3
      %p469 = scmp.ne.s32.totalorder %s464, %s466
      %p470 = scmp.eq.s32.totalorder %s43, 0
      %p471 = por %p469, %p470
      %p472 = scmp.ne.s32.totalorder %s464, %s466
      %p473 = scmp.eq.s32.totalorder %s48, 3
      %p474 = por %p472, %p473
      %p475 = scmp.ne.s32.totalorder %s466, %s467
      %p476 = scmp.eq.s32.totalorder %s48, 0
      %p477 = por %p475, %p476
      %p478 = scmp.ne.s32.totalorder %s466, %s467
      %p479 = scmp.eq.s32.totalorder %s49, 3
      %p480 = por %p478, %p479
      %p482 = scmp.ne.s32.totalorder %s467, %s481
      %p483 = scmp.eq.s32.totalorder %s49, 0
      %p484 = por %p482, %p483
      %s486 = sadd.s32 %s485, 1
      %p489 = scmp.eq.s32.totalorder %s43, 3
      %p490 = scmp.ne.s32.totalorder %s485, %s487
      %p491 = scmp.eq.s32.totalorder %s43, 0
      %p492 = por %p490, %p491
      %p493 = scmp.ne.s32.totalorder %s485, %s487
      %p494 = scmp.eq.s32.totalorder %s48, 3
      %p495 = por %p493, %p494
      %p496 = scmp.ne.s32.totalorder %s487, %s488
      %p497 = scmp.eq.s32.totalorder %s48, 0
      %p498 = por %p496, %p497
      %p499 = scmp.ne.s32.totalorder %s487, %s488
      %p500 = scmp.eq.s32.totalorder %s49, 3
      %p501 = por %p499, %p500
      %p503 = scmp.ne.s32.totalorder %s488, %s502
      %p504 = scmp.eq.s32.totalorder %s49, 0
      %p505 = por %p503, %p504
      %s506 = ssub.s32 %s50, %s62
      %p507 = scmp.eq.s32.totalorder %s506, 0
      %s509 = sadd.s32 %s508, 1
      %s510 = scalar_select %p507, %s508, %s509
      %p513 = pneg %p507
      %p514 = scmp.eq.s32.totalorder %s43, 3
      %p515 = por %p513, %p514
      %p516 = scmp.ne.s32.totalorder %s508, %s511
      %p517 = scmp.eq.s32.totalorder %s43, 0
      %p518 = por %p516, %p517
      %p519 = scmp.ne.s32.totalorder %s508, %s511
      %p520 = scmp.eq.s32.totalorder %s48, 3
      %p521 = por %p519, %p520
      %p522 = scmp.ne.s32.totalorder %s511, %s512
      %p523 = scmp.eq.s32.totalorder %s48, 0
      %p524 = por %p522, %p523
      %p525 = scmp.ne.s32.totalorder %s511, %s512
      %p526 = scmp.eq.s32.totalorder %s49, 3
      %p527 = por %p525, %p526
      %p529 = scmp.ne.s32.totalorder %s512, %s528
      %p530 = scmp.eq.s32.totalorder %s49, 0
      %p531 = por %p529, %p530
      %p532 = scmp.le.s32.totalorder 1, %s43
      %p533 = scmp.lt.s32.totalorder %s43, 5
      %p534 = pnand %p532, %p533
      %p535 = pneg %p534
      // Predicated region
      $region9: #{tpu_custom_call.1} parent=5 // pred_check
        _
      $region10: #{tpu_custom_call.1} parent=5 // pred_check_branch
        %537 = sbr.rel (%p534) target = $region12
      $region11: #{tpu_custom_call.1} parent=5 // pred_region
        %s538 = ssub.s32 %s43, 1
        // Predicated region
        $region13: #{tpu_custom_call.1} parent=11 // pred_check
          %p539 = pneg %p414
        $region14: #{tpu_custom_call.1} parent=11 // pred_check_branch
          %541 = sbr.rel (%p539) target = $region16
        $region15: #{tpu_custom_call.1} parent=11 // pred_region
          _
        $region16: #{tpu_custom_call.1} parent=11 // pred_fallthru
          _
        // Predicated region
        $region17: #{tpu_custom_call.1} parent=11 // pred_check
          %p542 = pneg %p435
        $region18: #{tpu_custom_call.1} parent=11 // pred_check_branch
          %544 = sbr.rel (%p542) target = $region20
        $region19: #{tpu_custom_call.1} parent=11 // pred_region
          _
        $region20: #{tpu_custom_call.1} parent=11 // pred_fallthru
          _
        // Predicated region
        $region21: #{tpu_custom_call.1} parent=11 // pred_check
          %p545 = pneg %p456
        $region22: #{tpu_custom_call.1} parent=11 // pred_check_branch
          %547 = sbr.rel (%p545) target = $region24
        $region23: #{tpu_custom_call.1} parent=11 // pred_region
          _
        $region24: #{tpu_custom_call.1} parent=11 // pred_fallthru
          _
        // Predicated region
        $region25: #{tpu_custom_call.1} parent=11 // pred_check
          %p548 = pneg %p477
        $region26: #{tpu_custom_call.1} parent=11 // pred_check_branch
          %550 = sbr.rel (%p548) target = $region28
        $region27: #{tpu_custom_call.1} parent=11 // pred_region
          %s552 = ssub.s32 256, 256
          %553 = vsyncadd [#allocation19], %s552
          %s554 = sshll.u32 [#allocation18], 4
          %s555 = int_to_ptr.vmem [resolvable:$true] %s554
          %560 = dma.hbm_to_vmem [thread:$0]  %s16, 256, %s555, [#allocation19], 64, 64, 4
        $region28: #{tpu_custom_call.1} parent=11 // pred_fallthru
          _
        // Predicated region
        $region29: #{tpu_custom_call.1} parent=11 // pred_check
          %p561 = pneg %p498
        $region30: #{tpu_custom_call.1} parent=11 // pred_check_branch
          %563 = sbr.rel (%p561) target = $region32
        $region31: #{tpu_custom_call.1} parent=11 // pred_region
          _
        $region32: #{tpu_custom_call.1} parent=11 // pred_fallthru
          _
      $region12: #{tpu_custom_call.1} parent=5 // pred_fallthru
        _
      %p564 = scmp.lt.s32.totalorder %s43, 4
      // Predicated region
      $region33: #{tpu_custom_call.1} parent=5 // pred_check
        %p565 = pneg %p564
      $region34: #{tpu_custom_call.1} parent=5 // pred_check_branch
        %567 = sbr.rel (%p565) target = $region36
      $region35: #{tpu_custom_call.1} parent=5 // pred_region
        // Predicated region
        $region37: #{tpu_custom_call.1} parent=35 // pred_check
          %p568 = pneg %p75
        $region38: #{tpu_custom_call.1} parent=35 // pred_check_branch
          %570 = sbr.rel (%p568) target = $region40
        $region39: #{tpu_custom_call.1} parent=35 // pred_region
          %s571 = sand.u32 %s65, 1
          %s572 = scalar_lea.sflag [#allocation4], %s571
          %s573 = sand.u32 %s65, 1
          %s574 = smul.addr %s573, 8
          %s575 = scalar_lea.vmem [#allocation3], %s574
          %s577 = ssub.s32 128, 128
          %578 = vsyncadd %s572, %s577
          %s579 = smul.addr %s50, 128
          %s580 = scalar_lea.hbm %s0, %s579
          %s582 = sshll.u32 %s575, 4
          %s583 = int_to_ptr.vmem [resolvable:$true] %s582
          %585 = dma.hbm_to_vmem [thread:$0]  %s580, 128, %s583, %s572
        $region40: #{tpu_custom_call.1} parent=35 // pred_fallthru
          _
        // Predicated region
        $region41: #{tpu_custom_call.1} parent=35 // pred_check
          %p586 = pneg %p101
        $region42: #{tpu_custom_call.1} parent=35 // pred_check_branch
          %588 = sbr.rel (%p586) target = $region44
        $region43: #{tpu_custom_call.1} parent=35 // pred_region
          %p589 = scmp.lt.s32.totalorder %s51, 1
          %s590 = scalar_select %p589, %s51, 1
          %s591 = smul.addr %s590, 4
          %s592 = smul.addr %s591, 4
          %s593 = scalar_lea.vmem %s1, %s592
        $region44: #{tpu_custom_call.1} parent=35 // pred_fallthru
          _
        // Predicated region
        $region45: #{tpu_custom_call.1} parent=35 // pred_check
          %p594 = pneg %p127
        $region46: #{tpu_custom_call.1} parent=35 // pred_check_branch
          %596 = sbr.rel (%p594) target = $region48
        $region47: #{tpu_custom_call.1} parent=35 // pred_region
          %s597 = sand.u32 %s43, 1
          %s598 = scalar_lea.sflag [#allocation7], %s597
          %s599 = sand.u32 %s117, 1
          %s600 = scalar_lea.vmem [#allocation6], %s599
          %s602 = ssub.s32 16, 16
          %603 = vsyncadd %s598, %s602
          %s604 = smul.addr %s51, 16
          %s605 = scalar_lea.hbm %s2, %s604
          %s607 = sshll.u32 %s600, 4
          %s608 = int_to_ptr.vmem [resolvable:$true] %s607
          %610 = dma.hbm_to_vmem [thread:$0]  %s605, 16, %s608, %s598
        $region48: #{tpu_custom_call.1} parent=35 // pred_fallthru
          _
        // Predicated region
        $region49: #{tpu_custom_call.1} parent=35 // pred_check
          %p611 = pneg %p153
        $region50: #{tpu_custom_call.1} parent=35 // pred_check_branch
          %613 = sbr.rel (%p611) target = $region52
        $region51: #{tpu_custom_call.1} parent=35 // pred_region
          %p614 = scmp.lt.s32.totalorder %s51, 1
          %s615 = scalar_select %p614, %s51, 1
          %s616 = smul.addr %s615, 4
          %s617 = smul.addr %s616, 4
          %s618 = scalar_lea.vmem %s3, %s617
        $region52: #{tpu_custom_call.1} parent=35 // pred_fallthru
          _
        // Predicated region
        $region53: #{tpu_custom_call.1} parent=35 // pred_check
          %p619 = pneg %p179
        $region54: #{tpu_custom_call.1} parent=35 // pred_check_branch
          %621 = sbr.rel (%p619) target = $region56
        $region55: #{tpu_custom_call.1} parent=35 // pred_region
          %s622 = sand.u32 %s43, 1
          %s623 = scalar_lea.sflag [#allocation7], %s622
          %s624 = sand.u32 %s169, 1
          %s625 = scalar_lea.vmem [#allocation8], %s624
          %s627 = ssub.s32 16, 16
          %628 = vsyncadd %s623, %s627
          %s629 = smul.addr %s51, 16
          %s630 = scalar_lea.hbm %s4, %s629
          %s632 = sshll.u32 %s625, 4
          %s633 = int_to_ptr.vmem [resolvable:$true] %s632
          %635 = dma.hbm_to_vmem [thread:$0]  %s630, 16, %s633, %s623
        $region56: #{tpu_custom_call.1} parent=35 // pred_fallthru
          _
        // Predicated region
        $region57: #{tpu_custom_call.1} parent=35 // pred_check
          %p636 = pneg %p205
        $region58: #{tpu_custom_call.1} parent=35 // pred_check_branch
          %638 = sbr.rel (%p636) target = $region60
        $region59: #{tpu_custom_call.1} parent=35 // pred_region
          %s639 = sand.u32 %s43, 1
          %s640 = scalar_lea.sflag [#allocation10], %s639
          %s641 = sand.u32 %s195, 1
          %s642 = scalar_lea.vmem [#allocation9], %s641
          %s644 = ssub.s32 16, 16
          %645 = vsyncadd %s640, %s644
          %s646 = smul.addr %s51, 16
          %s647 = scalar_lea.hbm %s5, %s646
          %s649 = sshll.u32 %s642, 4
          %s650 = int_to_ptr.vmem [resolvable:$true] %s649
          %652 = dma.hbm_to_vmem [thread:$0]  %s647, 16, %s650, %s640
        $region60: #{tpu_custom_call.1} parent=35 // pred_fallthru
          _
        // Predicated region
        $region61: #{tpu_custom_call.1} parent=35 // pred_check
          %p653 = pneg %p231
        $region62: #{tpu_custom_call.1} parent=35 // pred_check_branch
          %655 = sbr.rel (%p653) target = $region64
        $region63: #{tpu_custom_call.1} parent=35 // pred_region
          %s656 = sand.u32 %s43, 1
          %s657 = scalar_lea.sflag [#allocation10], %s656
          %s658 = sand.u32 %s221, 1
          %s659 = scalar_lea.vmem [#allocation11], %s658
          %s661 = ssub.s32 16, 16
          %662 = vsyncadd %s657, %s661
          %s663 = smul.addr %s51, 16
          %s664 = scalar_lea.hbm %s6, %s663
          %s666 = sshll.u32 %s659, 4
          %s667 = int_to_ptr.vmem [resolvable:$true] %s666
          %669 = dma.hbm_to_vmem [thread:$0]  %s664, 16, %s667, %s657
        $region64: #{tpu_custom_call.1} parent=35 // pred_fallthru
          _
        // Predicated region
        $region65: #{tpu_custom_call.1} parent=35 // pred_check
          %p670 = pneg %p257
        $region66: #{tpu_custom_call.1} parent=35 // pred_check_branch
          %672 = sbr.rel (%p670) target = $region68
        $region67: #{tpu_custom_call.1} parent=35 // pred_region
          %s673 = sand.u32 %s43, 1
          %s674 = scalar_lea.sflag [#allocation13], %s673
          %s675 = sand.u32 %s247, 1
          %s676 = scalar_lea.vmem [#allocation12], %s675
          %s678 = ssub.s32 16, 16
          %679 = vsyncadd %s674, %s678
          %s680 = smul.addr %s51, 16
          %s681 = scalar_lea.hbm %s7, %s680
          %s683 = sshll.u32 %s676, 4
          %s684 = int_to_ptr.vmem [resolvable:$true] %s683
          %686 = dma.hbm_to_vmem [thread:$0]  %s681, 16, %s684, %s674
        $region68: #{tpu_custom_call.1} parent=35 // pred_fallthru
          _
        // Predicated region
        $region69: #{tpu_custom_call.1} parent=35 // pred_check
          %p687 = pneg %p283
        $region70: #{tpu_custom_call.1} parent=35 // pred_check_branch
          %689 = sbr.rel (%p687) target = $region72
        $region71: #{tpu_custom_call.1} parent=35 // pred_region
          %s690 = sand.u32 %s43, 1
          %s691 = scalar_lea.sflag [#allocation13], %s690
          %s692 = sand.u32 %s273, 1
          %s693 = scalar_lea.vmem [#allocation14], %s692
          %s695 = ssub.s32 16, 16
          %696 = vsyncadd %s691, %s695
          %s697 = smul.addr %s51, 16
          %s698 = scalar_lea.hbm %s8, %s697
          %s700 = sshll.u32 %s693, 4
          %s701 = int_to_ptr.vmem [resolvable:$true] %s700
          %703 = dma.hbm_to_vmem [thread:$0]  %s698, 16, %s701, %s691
        $region72: #{tpu_custom_call.1} parent=35 // pred_fallthru
          _
        // Predicated region
        $region73: #{tpu_custom_call.1} parent=35 // pred_check
          %p704 = pneg %p309
        $region74: #{tpu_custom_call.1} parent=35 // pred_check_branch
          %706 = sbr.rel (%p704) target = $region76
        $region75: #{tpu_custom_call.1} parent=35 // pred_region
          %p707 = scmp.lt.s32.totalorder %s51, 1
          %s708 = scalar_select %p707, %s51, 1
          %s709 = smul.addr %s708, 4
          %s710 = smul.addr %s709, 4
          %s711 = scalar_lea.vmem %s9, %s710
        $region76: #{tpu_custom_call.1} parent=35 // pred_fallthru
          _
        // Predicated region
        $region77: #{tpu_custom_call.1} parent=35 // pred_check
          %p712 = pneg %p335
        $region78: #{tpu_custom_call.1} parent=35 // pred_check_branch
          %714 = sbr.rel (%p712) target = $region80
        $region79: #{tpu_custom_call.1} parent=35 // pred_region
          %s715 = sand.u32 %s43, 1
          %s716 = scalar_lea.sflag [#allocation16], %s715
          %s717 = sand.u32 %s325, 1
          %s718 = scalar_lea.vmem [#allocation15], %s717
          %s720 = ssub.s32 16, 16
          %721 = vsyncadd %s716, %s720
          %s722 = smul.addr %s51, 16
          %s723 = scalar_lea.hbm %s10, %s722
          %s725 = sshll.u32 %s718, 4
          %s726 = int_to_ptr.vmem [resolvable:$true] %s725
          %728 = dma.hbm_to_vmem [thread:$0]  %s723, 16, %s726, %s716
        $region80: #{tpu_custom_call.1} parent=35 // pred_fallthru
          _
        // Predicated region
        $region81: #{tpu_custom_call.1} parent=35 // pred_check
          %p729 = pneg %p361
        $region82: #{tpu_custom_call.1} parent=35 // pred_check_branch
          %731 = sbr.rel (%p729) target = $region84
        $region83: #{tpu_custom_call.1} parent=35 // pred_region
          %p732 = scmp.lt.s32.totalorder %s51, 1
          %s733 = scalar_select %p732, %s51, 1
          %s734 = smul.addr %s733, 8
          %s735 = smul.addr %s734, 4
          %s736 = scalar_lea.vmem %s11, %s735
        $region84: #{tpu_custom_call.1} parent=35 // pred_fallthru
          _
        // Predicated region
        $region85: #{tpu_custom_call.1} parent=35 // pred_check
          %p737 = pneg %p387
        $region86: #{tpu_custom_call.1} parent=35 // pred_check_branch
          %739 = sbr.rel (%p737) target = $region88
        $region87: #{tpu_custom_call.1} parent=35 // pred_region
          %s740 = sand.u32 %s43, 1
          %s741 = scalar_lea.sflag [#allocation16], %s740
          %s742 = sand.u32 %s377, 1
          %s743 = scalar_lea.vmem [#allocation17], %s742
          %s745 = ssub.s32 16, 16
          %746 = vsyncadd %s741, %s745
          %s747 = smul.addr %s51, 16
          %s748 = scalar_lea.hbm %s12, %s747
          %s750 = sshll.u32 %s743, 4
          %s751 = int_to_ptr.vmem [resolvable:$true] %s750
          %753 = dma.hbm_to_vmem [thread:$0]  %s748, 16, %s751, %s741
        $region88: #{tpu_custom_call.1} parent=35 // pred_fallthru
          _
      $region36: #{tpu_custom_call.1} parent=5 // pred_fallthru
        _
      %p754 = scmp.le.s32.totalorder 1, %s43
      %p755 = scmp.lt.s32.totalorder %s43, 5
      %p756 = pnand %p754, %p755
      %p757 = pneg %p756
      // Predicated region
      $region89: #{tpu_custom_call.1} parent=5 // pred_check
        _
      $region90: #{tpu_custom_call.1} parent=5 // pred_check_branch
        %759 = sbr.rel (%p756) target = $region92
      $region91: #{tpu_custom_call.1} parent=5 // pred_region
        %s760 = ssub.s32 %s43, 1
        %s761 = sand.u32 %s68, 1
        %s762 = scalar_lea.sflag [#allocation4], %s761
        %s763 = sand.u32 %s68, 1
        %s764 = smul.addr %s763, 8
        %s765 = scalar_lea.vmem [#allocation3], %s764
        // Predicated region
        $region93: #{tpu_custom_call.1} parent=91 // pred_check
          %p766 = pneg %p81
        $region94: #{tpu_custom_call.1} parent=91 // pred_check_branch
          %768 = sbr.rel (%p766) target = $region96
        $region95: #{tpu_custom_call.1} parent=91 // pred_region
          %769 = dma.done %s762, 128
        $region96: #{tpu_custom_call.1} parent=91 // pred_fallthru
          _
        %s770 = sand.u32 %s48, 1
        %s771 = scalar_lea.sflag [#allocation7], %s770
        %s772 = sand.u32 %s120, 1
        %s773 = scalar_lea.vmem [#allocation6], %s772
        // Predicated region
        $region97: #{tpu_custom_call.1} parent=91 // pred_check
          %p774 = pneg %p133
        $region98: #{tpu_custom_call.1} parent=91 // pred_check_branch
          %776 = sbr.rel (%p774) target = $region100
        $region99: #{tpu_custom_call.1} parent=91 // pred_region
          %777 = dma.done %s771, 16
        $region100: #{tpu_custom_call.1} parent=91 // pred_fallthru
          _
        %s778 = sand.u32 %s48, 1
        %s779 = scalar_lea.sflag [#allocation7], %s778
        %s780 = sand.u32 %s172, 1
        %s781 = scalar_lea.vmem [#allocation8], %s780
        // Predicated region
        $region101: #{tpu_custom_call.1} parent=91 // pred_check
          %p782 = pneg %p185
        $region102: #{tpu_custom_call.1} parent=91 // pred_check_branch
          %784 = sbr.rel (%p782) target = $region104
        $region103: #{tpu_custom_call.1} parent=91 // pred_region
          %785 = dma.done %s779, 16
        $region104: #{tpu_custom_call.1} parent=91 // pred_fallthru
          _
        %s786 = sand.u32 %s48, 1
        %s787 = scalar_lea.sflag [#allocation10], %s786
        %s788 = sand.u32 %s198, 1
        %s789 = scalar_lea.vmem [#allocation9], %s788
        // Predicated region
        $region105: #{tpu_custom_call.1} parent=91 // pred_check
          %p790 = pneg %p211
        $region106: #{tpu_custom_call.1} parent=91 // pred_check_branch
          %792 = sbr.rel (%p790) target = $region108
        $region107: #{tpu_custom_call.1} parent=91 // pred_region
          %793 = dma.done %s787, 16
        $region108: #{tpu_custom_call.1} parent=91 // pred_fallthru
          _
        %s794 = sand.u32 %s48, 1
        %s795 = scalar_lea.sflag [#allocation10], %s794
        %s796 = sand.u32 %s224, 1
        %s797 = scalar_lea.vmem [#allocation11], %s796
        // Predicated region
        $region109: #{tpu_custom_call.1} parent=91 // pred_check
          %p798 = pneg %p237
        $region110: #{tpu_custom_call.1} parent=91 // pred_check_branch
          %800 = sbr.rel (%p798) target = $region112
        $region111: #{tpu_custom_call.1} parent=91 // pred_region
          %801 = dma.done %s795, 16
        $region112: #{tpu_custom_call.1} parent=91 // pred_fallthru
          _
        %s802 = sand.u32 %s48, 1
        %s803 = scalar_lea.sflag [#allocation13], %s802
        %s804 = sand.u32 %s250, 1
        %s805 = scalar_lea.vmem [#allocation12], %s804
        // Predicated region
        $region113: #{tpu_custom_call.1} parent=91 // pred_check
          %p806 = pneg %p263
        $region114: #{tpu_custom_call.1} parent=91 // pred_check_branch
          %808 = sbr.rel (%p806) target = $region116
        $region115: #{tpu_custom_call.1} parent=91 // pred_region
          %809 = dma.done %s803, 16
        $region116: #{tpu_custom_call.1} parent=91 // pred_fallthru
          _
        %s810 = sand.u32 %s48, 1
        %s811 = scalar_lea.sflag [#allocation13], %s810
        %s812 = sand.u32 %s276, 1
        %s813 = scalar_lea.vmem [#allocation14], %s812
        // Predicated region
        $region117: #{tpu_custom_call.1} parent=91 // pred_check
          %p814 = pneg %p289
        $region118: #{tpu_custom_call.1} parent=91 // pred_check_branch
          %816 = sbr.rel (%p814) target = $region120
        $region119: #{tpu_custom_call.1} parent=91 // pred_region
          %817 = dma.done %s811, 16
        $region120: #{tpu_custom_call.1} parent=91 // pred_fallthru
          _
        %s818 = sand.u32 %s48, 1
        %s819 = scalar_lea.sflag [#allocation16], %s818
        %s820 = sand.u32 %s328, 1
        %s821 = scalar_lea.vmem [#allocation15], %s820
        // Predicated region
        $region121: #{tpu_custom_call.1} parent=91 // pred_check
          %p822 = pneg %p341
        $region122: #{tpu_custom_call.1} parent=91 // pred_check_branch
          %824 = sbr.rel (%p822) target = $region124
        $region123: #{tpu_custom_call.1} parent=91 // pred_region
          %825 = dma.done %s819, 16
        $region124: #{tpu_custom_call.1} parent=91 // pred_fallthru
          _
        %s826 = sand.u32 %s48, 1
        %s827 = scalar_lea.sflag [#allocation16], %s826
        %s828 = sand.u32 %s380, 1
        %s829 = scalar_lea.vmem [#allocation17], %s828
        // Predicated region
        $region125: #{tpu_custom_call.1} parent=91 // pred_check
          %p830 = pneg %p393
        $region126: #{tpu_custom_call.1} parent=91 // pred_check_branch
          %832 = sbr.rel (%p830) target = $region128
        $region127: #{tpu_custom_call.1} parent=91 // pred_region
          %833 = dma.done %s827, 16
        $region128: #{tpu_custom_call.1} parent=91 // pred_fallthru
          _
        // Predicated region
        $region129: #{tpu_custom_call.1} parent=91 // pred_check
          %p834 = pneg %p477
        $region130: #{tpu_custom_call.1} parent=91 // pred_check_branch
          %836 = sbr.rel (%p834) target = $region132
        $region131: #{tpu_custom_call.1} parent=91 // pred_region
          %837 = dma.done [#allocation19], 256
        $region132: #{tpu_custom_call.1} parent=91 // pred_fallthru
          _
        %s838 = sand.u32 %s68, 1
        %s839 = scalar_lea.sflag [#allocation4], %s838
        %s840 = sand.u32 %s68, 1
        %s841 = smul.addr %s840, 8
        %s842 = scalar_lea.vmem [#allocation3], %s841
        %p843 = pneg %p81
        %p844 = pneg %p78
        %p845 = scmp.lt.s32.totalorder %s53, 1
        %s846 = scalar_select %p845, %s53, 1
        %s847 = smul.addr %s846, 4
        %s848 = smul.addr %s847, 4
        %s849 = scalar_lea.vmem %s1, %s848
        %p850 = pneg %p107
        %p851 = pneg %p104
        %s852 = sand.u32 %s48, 1
        %s853 = scalar_lea.sflag [#allocation7], %s852
        %s854 = sand.u32 %s120, 1
        %s855 = scalar_lea.vmem [#allocation6], %s854
        %p856 = pneg %p133
        %p857 = pneg %p130
        %p858 = scmp.lt.s32.totalorder %s53, 1
        %s859 = scalar_select %p858, %s53, 1
        %s860 = smul.addr %s859, 4
        %s861 = smul.addr %s860, 4
        %s862 = scalar_lea.vmem %s3, %s861
        %p863 = pneg %p159
        %p864 = pneg %p156
        %s865 = sand.u32 %s48, 1
        %s866 = scalar_lea.sflag [#allocation7], %s865
        %s867 = sand.u32 %s172, 1
        %s868 = scalar_lea.vmem [#allocation8], %s867
        %p869 = pneg %p185
        %p870 = pneg %p182
        %s871 = sand.u32 %s48, 1
        %s872 = scalar_lea.sflag [#allocation10], %s871
        %s873 = sand.u32 %s198, 1
        %s874 = scalar_lea.vmem [#allocation9], %s873
        %p875 = pneg %p211
        %p876 = pneg %p208
        %s877 = sand.u32 %s48, 1
        %s878 = scalar_lea.sflag [#allocation10], %s877
        %s879 = sand.u32 %s224, 1
        %s880 = scalar_lea.vmem [#allocation11], %s879
        %p881 = pneg %p237
        %p882 = pneg %p234
        %s883 = sand.u32 %s48, 1
        %s884 = scalar_lea.sflag [#allocation13], %s883
        %s885 = sand.u32 %s250, 1
        %s886 = scalar_lea.vmem [#allocation12], %s885
        %p887 = pneg %p263
        %p888 = pneg %p260
        %s889 = sand.u32 %s48, 1
        %s890 = scalar_lea.sflag [#allocation13], %s889
        %s891 = sand.u32 %s276, 1
        %s892 = scalar_lea.vmem [#allocation14], %s891
        %p893 = pneg %p289
        %p894 = pneg %p286
        %p895 = scmp.lt.s32.totalorder %s53, 1
        %s896 = scalar_select %p895, %s53, 1
        %s897 = smul.addr %s896, 4
        %s898 = smul.addr %s897, 4
        %s899 = scalar_lea.vmem %s9, %s898
        %p900 = pneg %p315
        %p901 = pneg %p312
        %s902 = sand.u32 %s48, 1
        %s903 = scalar_lea.sflag [#allocation16], %s902
        %s904 = sand.u32 %s328, 1
        %s905 = scalar_lea.vmem [#allocation15], %s904
        %p906 = pneg %p341
        %p907 = pneg %p338
        %p908 = scmp.lt.s32.totalorder %s53, 1
        %s909 = scalar_select %p908, %s53, 1
        %s910 = smul.addr %s909, 8
        %s911 = smul.addr %s910, 4
        %s912 = scalar_lea.vmem %s11, %s911
        %p913 = pneg %p367
        %p914 = pneg %p364
        %s915 = sand.u32 %s48, 1
        %s916 = scalar_lea.sflag [#allocation16], %s915
        %s917 = sand.u32 %s380, 1
        %s918 = scalar_lea.vmem [#allocation17], %s917
        %p919 = pneg %p393
        %p920 = pneg %p390
        %p921 = pneg %p414
        %p922 = pneg %p411
        %p923 = pneg %p435
        %p924 = pneg %p432
        %p925 = pneg %p456
        %p926 = pneg %p453
        %p927 = pneg %p477
        %p928 = pneg %p474
        %p929 = pneg %p498
        %p930 = pneg %p495
        %p931 = pneg %p524
        %p932 = pneg %p521
        %s933 = sand.u32 %s511, 1
        %s934 = scalar_lea.sflag [#allocation5], %s933
        %s935 = sand.u32 %s511, 1
        %s936 = scalar_lea.vmem [#allocation20], %s935
        %p937 = scmp.lt.s32.totalorder %s53, 1
        %s938 = scalar_select %p937, %s53, 1
        %s939 = smul.addr %s938, 4
        %s940 = smul.addr %s939, 4
        %s941 = scalar_lea.vmem %s1, %s940
        %p942 = scmp.lt.s32.totalorder %s53, 1
        %s943 = scalar_select %p942, %s53, 1
        %s944 = smul.addr %s943, 4
        %s945 = smul.addr %s944, 4
        %s946 = scalar_lea.vmem %s3, %s945
        %p947 = scmp.lt.s32.totalorder %s53, 1
        %s948 = scalar_select %p947, %s53, 1
        %s949 = smul.addr %s948, 4
        %s950 = smul.addr %s949, 4
        %s951 = scalar_lea.vmem %s9, %s950
        %p952 = scmp.lt.s32.totalorder %s53, 1
        %s953 = scalar_select %p952, %s53, 1
        %s954 = smul.addr %s953, 8
        %s955 = smul.addr %s954, 4
        %s956 = scalar_lea.vmem %s11, %s955
        %p958 = scmp.eq.s32.totalorder %s53, 0
        // Predicated region
        $region133: #{tpu_custom_call.1} parent=91 // pred_check
          %p959 = pneg %p958
        $region134: #{tpu_custom_call.1} parent=91 // pred_check_branch
          %961 = sbr.rel (%p959) target = $region136
        $region135: #{tpu_custom_call.1} parent=91 // pred_region
          %v962 = vld [vmem:[%s765] sm:$0xff]
          %vm963 = vcmask 261120
          %964 = vst.msk [vmem:[#allocation2] sm:$0xff] %vm963, %v962
        $region136: #{tpu_custom_call.1} parent=91 // pred_fallthru
          _
        %v965 = vld [vmem:[#allocation2] sm:$0xff]
        %v966 = vld [vmem:[%s789] sm:$0x1]
        %v967 = vld [vmem:[%s797] sm:$0x1]
        %vm968 = vcmask 261120
        %v969 = vsel %vm968, %v965, 0.0
        %970 = vadd.xlane.f32.xlu0 %v969
        %v971 = vpop.xlane.xlu0 %970
        %v972 = vrcp.pop 32.0
        %v973 = vmul.f32 %v971, %v972
        %v974 = vsub.f32 %v965, %v973
        %v975 = vmul.f32 %v974, %v974
        %v976 = vsel %vm968, %v975, 0.0
        %977 = vadd.xlane.f32.xlu0 %v976
        %v978 = vpop.xlane.xlu0 %977
        %v979 = vmul.f32 %v978, %v972
        %v980 = vadd.f32 %v979, 1e-05
        %v981 = vrsqrt.pop %v980
        %v982 = vmul.f32 %v974, %v981
        %v984 = vlaneseq
        %v985 = vshrl.u32 %v984, 7
        %v986 = vsub.s32 0, %v985
        %v987 = vrot.slane %v966, %v986
        %v989 = vmul.f32 %v982, %v987
        %v991 = vlaneseq
        %v992 = vshrl.u32 %v991, 7
        %v993 = vsub.s32 0, %v992
        %v994 = vrot.slane %v967, %v993
        %v996 = vadd.f32 %v989, %v994
        %v997 = vpack.c.bf16 %v996, %v996
        %v998 = vld [vmem:[%s941] sm:$0xf]
        %v999 = vld [vmem:[%s941 + $0x4] sm:$0xf]
        %v1000 = vld [vmem:[%s941 + $0x8] sm:$0xf]
        %v1001 = vld [vmem:[%s941 + $0xc] sm:$0xf]
        %v1002 = vld [vmem:[%s773] sm:$0x1]
        %v1004 = vlaneseq
        %v1005 = vshrl.u32 %v1004, 7
        %v1006 = vsub.s32 0, %v1005
        %v1007 = vrot.slane %v1002, %v1006
        %v1013 = vunpack.c.l.b16 %v998
        %v1014 = vunpack.c.l.b16 %v999
        %v1015 = vunpack.c.l.b16 %v1000
        %v1016 = vunpack.c.l.b16 %v1001
        %v1017 = vpack.c.b16 %v1014, %v1013
        %v1018 = vpack.c.b16 %v1016, %v1015
        %v1022 = vsel %vm968, %v997, 0
        %1024 = vmatprep.subr.bf16.mxu0 0
        %1025 = vmatpush1.bf16.msra.mxu0 %v1017
        %1026 = vmatprep.subr.bf16.mxu0 0
        %1027 = vmatpush1.bf16.msra.mxu0 %v1018
        %1028 = vmatprep.subr.bf16.mxu0 0
        %1029 = vmatpush1.bf16.msra.mxu0 0
        %1030 = vmatprep.subr.bf16.mxu0 0
        %1031 = vmatpush1.bf16.msra.mxu0 0
        %1032 = vmatprep.subr.bf16.mxu0 0
        %1033 = vmatpush1.bf16.msra.mxu0 0
        %1034 = vmatprep.subr.bf16.mxu0 0
        %1035 = vmatpush1.bf16.msra.mxu0 0
        %1036 = vmatprep.subr.bf16.mxu0 0
        %1037 = vmatpush1.bf16.msra.mxu0 0
        %1038 = vmatprep.subr.bf16.mxu0 0
        %1039 = vmatpush1.bf16.msra.mxu0 0
        %1040 = vmatprep.subr.bf16.mxu0 0
        %1041 = vmatpush1.bf16.msra.mxu0 0
        %1042 = vmatprep.subr.bf16.mxu0 0
        %1043 = vmatpush1.bf16.msra.mxu0 0
        %1044 = vmatprep.subr.bf16.mxu0 0
        %1045 = vmatpush1.bf16.msra.mxu0 0
        %1046 = vmatprep.subr.bf16.mxu0 0
        %1047 = vmatpush1.bf16.msra.mxu0 0
        %1048 = vmatprep.subr.bf16.mxu0 0
        %1049 = vmatpush1.bf16.msra.mxu0 0
        %1050 = vmatprep.subr.bf16.mxu0 0
        %1051 = vmatpush1.bf16.msra.mxu0 0
        %1052 = vmatprep.subr.bf16.mxu0 0
        %1053 = vmatpush1.bf16.msra.mxu0 0
        %1054 = vmatprep.subr.bf16.mxu0 0
        %1055 = vmatpush1.bf16.msra.mxu0 0
        %1056 = vmatprep.mubr.bf16.mxu0 0
        %1057 = vmatmul.mubr.bf16.gmra.mrb[0].mxu0 %v1022
        %v1058 = vpop.f32.mrb[0].mxu0
        %v1059 = vadd.f32 %v1007, %v1058
        %v1060 = vpop.f32.mrb[0].mxu0
        %v1061 = vpop.f32.mrb[0].mxu0
        %v1062 = vpop.f32.mrb[0].mxu0
        %1063 = vdwg.mxu0
        %v1064 = vld [vmem:[%s946] sm:$0xf]
        %v1065 = vld [vmem:[%s946 + $0x4] sm:$0xf]
        %v1066 = vld [vmem:[%s946 + $0x8] sm:$0xf]
        %v1067 = vld [vmem:[%s946 + $0xc] sm:$0xf]
        %v1068 = vpack.c.bf16 %v1059, %v1059
        %1070 = vrot.lane.b32.xlu0 %v1068, 96
        %v1071 = vpop.permute.xlu0 %1070
        %vm1072 = vcmask 64512
        %v1074 = vsel %vm1072, %v1068, 0
        %v1077 = vsel %vm1072, %v1071, 0
        %1079 = vmatprep.subr.bf16.mxu0 0
        %1080 = vmatpush1.bf16.xpose.msra.mxu0 %v1077
        %1081 = vmatprep.subr.bf16.mxu0 0
        %1082 = vmatpush1.bf16.xpose.msra.mxu0 0
        %1083 = vmatprep.subr.bf16.mxu0 0
        %1084 = vmatpush1.bf16.xpose.msra.mxu0 0
        %1085 = vmatprep.subr.bf16.mxu0 0
        %1086 = vmatpush1.bf16.xpose.msra.mxu0 0
        %1087 = vmatprep.subr.bf16.mxu0 0
        %1088 = vmatpush1.bf16.xpose.msra.mxu0 0
        %1089 = vmatprep.subr.bf16.mxu0 0
        %1090 = vmatpush1.bf16.xpose.msra.mxu0 0
        %1091 = vmatprep.subr.bf16.mxu0 0
        %1092 = vmatpush1.bf16.xpose.msra.mxu0 0
        %1093 = vmatprep.subr.bf16.mxu0 0
        %1094 = vmatpush1.bf16.xpose.msra.mxu0 0
        %1095 = vmatprep.subr.bf16.mxu0 0
        %1096 = vmatpush1.bf16.xpose.msra.mxu0 0
        %1097 = vmatprep.subr.bf16.mxu0 0
        %1098 = vmatpush1.bf16.xpose.msra.mxu0 0
        %1099 = vmatprep.subr.bf16.mxu0 0
        %1100 = vmatpush1.bf16.xpose.msra.mxu0 0
        %1101 = vmatprep.subr.bf16.mxu0 0
        %1102 = vmatpush1.bf16.xpose.msra.mxu0 0
        %1103 = vmatprep.subr.bf16.mxu0 0
        %1104 = vmatpush1.bf16.xpose.msra.mxu0 0
        %1105 = vmatprep.subr.bf16.mxu0 0
        %1106 = vmatpush1.bf16.xpose.msra.mxu0 0
        %1107 = vmatprep.subr.bf16.mxu0 0
        %1108 = vmatpush1.bf16.xpose.msra.mxu0 0
        %1109 = vmatprep.subr.bf16.mxu0 0
        %1110 = vmatpush1.bf16.xpose.msra.mxu0 0
        %1111 = vmatprep.mubr.bf16.mxu0 0
        %1112 = vmatmul.mubr.bf16.gmra.mrb[0].mxu0 %v1074
        %v1113 = vpop.f32.mrb[0].mxu0
        %v1114 = vadd.f32 0.0, %v1113
        %v1115 = vpop.f32.mrb[0].mxu0
        %v1116 = vpop.f32.mrb[0].mxu0
        %v1117 = vpop.f32.mrb[0].mxu0
        %1118 = vdwg.mxu0
        %v1119 = vsel %vm1072, %v1114, -inf
        %1120 = vmax.xlane.f32.xlu0 %v1119
        %v1121 = vpop.xlane.xlu0 %1120
        %v1122 = vsub.f32 %v1114, %v1121
        %v1123 = vmul.f32 %v1122, 1.442695
        %v1124 = vpow.pop %v1123
        %v1125 = vsel %vm1072, %v1124, 0.0
        %1126 = vadd.xlane.f32.xlu0 %v1125
        %v1127 = vpop.xlane.xlu0 %1126
        %v1128 = vrcp.pop %v1127
        %v1129 = vmul.f32 %v1124, %v1128
        %v1130 = vpack.c.bf16 %v1129, %v1129
        %1131 = vrot.lane.b32.xlu0 %v1068, 64
        %v1132 = vpop.permute.xlu0 %1131
        %v1134 = vsel %vm1072, %v1130, 0
        %vm1136 = vcmask 1043456
        %v1138 = vsel %vm1136, %v1132, 0
        %1140 = vmatprep.subr.bf16.mxu0 0
        %1141 = vmatpush1.bf16.msra.mxu0 %v1138
        %1142 = vmatprep.subr.bf16.mxu0 0
        %1143 = vmatpush1.bf16.msra.mxu0 0
        %1144 = vmatprep.subr.bf16.mxu0 0
        %1145 = vmatpush1.bf16.msra.mxu0 0
        %1146 = vmatprep.subr.bf16.mxu0 0
        %1147 = vmatpush1.bf16.msra.mxu0 0
        %1148 = vmatprep.subr.bf16.mxu0 0
        %1149 = vmatpush1.bf16.msra.mxu0 0
        %1150 = vmatprep.subr.bf16.mxu0 0
        %1151 = vmatpush1.bf16.msra.mxu0 0
        %1152 = vmatprep.subr.bf16.mxu0 0
        %1153 = vmatpush1.bf16.msra.mxu0 0
        %1154 = vmatprep.subr.bf16.mxu0 0
        %1155 = vmatpush1.bf16.msra.mxu0 0
        %1156 = vmatprep.subr.bf16.mxu0 0
        %1157 = vmatpush1.bf16.msra.mxu0 0
        %1158 = vmatprep.subr.bf16.mxu0 0
        %1159 = vmatpush1.bf16.msra.mxu0 0
        %1160 = vmatprep.subr.bf16.mxu0 0
        %1161 = vmatpush1.bf16.msra.mxu0 0
        %1162 = vmatprep.subr.bf16.mxu0 0
        %1163 = vmatpush1.bf16.msra.mxu0 0
        %1164 = vmatprep.subr.bf16.mxu0 0
        %1165 = vmatpush1.bf16.msra.mxu0 0
        %1166 = vmatprep.subr.bf16.mxu0 0
        %1167 = vmatpush1.bf16.msra.mxu0 0
        %1168 = vmatprep.subr.bf16.mxu0 0
        %1169 = vmatpush1.bf16.msra.mxu0 0
        %1170 = vmatprep.subr.bf16.mxu0 0
        %1171 = vmatpush1.bf16.msra.mxu0 0
        %1172 = vmatprep.mubr.bf16.mxu0 0
        %1173 = vmatmul.mubr.bf16.gmra.mrb[0].mxu0 %v1134
        %v1174 = vpop.f32.mrb[0].mxu0
        %v1175 = vadd.f32 0.0, %v1174
        %v1176 = vpop.f32.mrb[0].mxu0
        %v1177 = vpop.f32.mrb[0].mxu0
        %v1178 = vpop.f32.mrb[0].mxu0
        %1179 = vdwg.mxu0
        %v1180 = vpack.c.bf16 %v1175, %v1175
        %1181 = vrot.lane.b32.xlu0 %v1068, 120
        %v1182 = vpop.permute.xlu0 %1181
        %1183 = vrot.lane.b32.xlu0 %v1068, 88
        %v1184 = vpop.permute.xlu0 %1183
        %v1186 = vsel %vm1072, %v1182, 0
        %v1189 = vsel %vm1072, %v1184, 0
        %1191 = vmatprep.subr.bf16.mxu0 0
        %1192 = vmatpush1.bf16.xpose.msra.mxu0 %v1189
        %1193 = vmatprep.subr.bf16.mxu0 0
        %1194 = vmatpush1.bf16.xpose.msra.mxu0 0
        %1195 = vmatprep.subr.bf16.mxu0 0
        %1196 = vmatpush1.bf16.xpose.msra.mxu0 0
        %1197 = vmatprep.subr.bf16.mxu0 0
        %1198 = vmatpush1.bf16.xpose.msra.mxu0 0
        %1199 = vmatprep.subr.bf16.mxu0 0
        %1200 = vmatpush1.bf16.xpose.msra.mxu0 0
        %1201 = vmatprep.subr.bf16.mxu0 0
        %1202 = vmatpush1.bf16.xpose.msra.mxu0 0
        %1203 = vmatprep.subr.bf16.mxu0 0
        %1204 = vmatpush1.bf16.xpose.msra.mxu0 0
        %1205 = vmatprep.subr.bf16.mxu0 0
        %1206 = vmatpush1.bf16.xpose.msra.mxu0 0
        %1207 = vmatprep.subr.bf16.mxu0 0
        %1208 = vmatpush1.bf16.xpose.msra.mxu0 0
        %1209 = vmatprep.subr.bf16.mxu0 0
        %1210 = vmatpush1.bf16.xpose.msra.mxu0 0
        %1211 = vmatprep.subr.bf16.mxu0 0
        %1212 = vmatpush1.bf16.xpose.msra.mxu0 0
        %1213 = vmatprep.subr.bf16.mxu0 0
        %1214 = vmatpush1.bf16.xpose.msra.mxu0 0
        %1215 = vmatprep.subr.bf16.mxu0 0
        %1216 = vmatpush1.bf16.xpose.msra.mxu0 0
        %1217 = vmatprep.subr.bf16.mxu0 0
        %1218 = vmatpush1.bf16.xpose.msra.mxu0 0
        %1219 = vmatprep.subr.bf16.mxu0 0
        %1220 = vmatpush1.bf16.xpose.msra.mxu0 0
        %1221 = vmatprep.subr.bf16.mxu0 0
        %1222 = vmatpush1.bf16.xpose.msra.mxu0 0
        %1223 = vmatprep.mubr.bf16.mxu0 0
        %1224 = vmatmul.mubr.bf16.gmra.mrb[0].mxu0 %v1186
        %v1225 = vpop.f32.mrb[0].mxu0
        %v1226 = vadd.f32 0.0, %v1225
        %v1227 = vpop.f32.mrb[0].mxu0
        %v1228 = vpop.f32.mrb[0].mxu0
        %v1229 = vpop.f32.mrb[0].mxu0
        %1230 = vdwg.mxu0
        %v1231 = vsel %vm1072, %v1226, -inf
        %1232 = vmax.xlane.f32.xlu0 %v1231
        %v1233 = vpop.xlane.xlu0 %1232
        %v1234 = vsub.f32 %v1226, %v1233
        %v1235 = vmul.f32 %v1234, 1.442695
        %v1236 = vpow.pop %v1235
        %v1237 = vsel %vm1072, %v1236, 0.0
        %1238 = vadd.xlane.f32.xlu0 %v1237
        %v1239 = vpop.xlane.xlu0 %1238
        %v1240 = vrcp.pop %v1239
        %v1241 = vmul.f32 %v1236, %v1240
        %v1242 = vpack.c.bf16 %v1241, %v1241
        %1243 = vrot.lane.b32.xlu0 %v1068, 56
        %v1244 = vpop.permute.xlu0 %1243
        %v1246 = vsel %vm1072, %v1242, 0
        %v1249 = vsel %vm1136, %v1244, 0
        %1251 = vmatprep.subr.bf16.mxu0 0
        %1252 = vmatpush1.bf16.msra.mxu0 %v1249
        %1253 = vmatprep.subr.bf16.mxu0 0
        %1254 = vmatpush1.bf16.msra.mxu0 0
        %1255 = vmatprep.subr.bf16.mxu0 0
        %1256 = vmatpush1.bf16.msra.mxu0 0
        %1257 = vmatprep.subr.bf16.mxu0 0
        %1258 = vmatpush1.bf16.msra.mxu0 0
        %1259 = vmatprep.subr.bf16.mxu0 0
        %1260 = vmatpush1.bf16.msra.mxu0 0
        %1261 = vmatprep.subr.bf16.mxu0 0
        %1262 = vmatpush1.bf16.msra.mxu0 0
        %1263 = vmatprep.subr.bf16.mxu0 0
        %1264 = vmatpush1.bf16.msra.mxu0 0
        %1265 = vmatprep.subr.bf16.mxu0 0
        %1266 = vmatpush1.bf16.msra.mxu0 0
        %1267 = vmatprep.subr.bf16.mxu0 0
        %1268 = vmatpush1.bf16.msra.mxu0 0
        %1269 = vmatprep.subr.bf16.mxu0 0
        %1270 = vmatpush1.bf16.msra.mxu0 0
        %1271 = vmatprep.subr.bf16.mxu0 0
        %1272 = vmatpush1.bf16.msra.mxu0 0
        %1273 = vmatprep.subr.bf16.mxu0 0
        %1274 = vmatpush1.bf16.msra.mxu0 0
        %1275 = vmatprep.subr.bf16.mxu0 0
        %1276 = vmatpush1.bf16.msra.mxu0 0
        %1277 = vmatprep.subr.bf16.mxu0 0
        %1278 = vmatpush1.bf16.msra.mxu0 0
        %1279 = vmatprep.subr.bf16.mxu0 0
        %1280 = vmatpush1.bf16.msra.mxu0 0
        %1281 = vmatprep.subr.bf16.mxu0 0
        %1282 = vmatpush1.bf16.msra.mxu0 0
        %1283 = vmatprep.mubr.bf16.mxu0 0
        %1284 = vmatmul.mubr.bf16.gmra.mrb[0].mxu0 %v1246
        %v1285 = vpop.f32.mrb[0].mxu0
        %v1286 = vadd.f32 0.0, %v1285
        %v1287 = vpop.f32.mrb[0].mxu0
        %v1288 = vpop.f32.mrb[0].mxu0
        %v1289 = vpop.f32.mrb[0].mxu0
        %1290 = vdwg.mxu0
        %v1291 = vpack.c.bf16 %v1286, %v1286
        %v1293 = vsel %vm1072, %v1291, 0
        %v1296 = vsel %vm1136, %v1065, 0
        %1298 = vmatprep.subr.bf16.mxu0 0
        %1299 = vmatpush1.bf16.msra.mxu0 %v1296
        %1300 = vmatprep.subr.bf16.mxu0 0
        %1301 = vmatpush1.bf16.msra.mxu0 0
        %1302 = vmatprep.subr.bf16.mxu0 0
        %1303 = vmatpush1.bf16.msra.mxu0 0
        %1304 = vmatprep.subr.bf16.mxu0 0
        %1305 = vmatpush1.bf16.msra.mxu0 0
        %1306 = vmatprep.subr.bf16.mxu0 0
        %1307 = vmatpush1.bf16.msra.mxu0 0
        %1308 = vmatprep.subr.bf16.mxu0 0
        %1309 = vmatpush1.bf16.msra.mxu0 0
        %1310 = vmatprep.subr.bf16.mxu0 0
        %1311 = vmatpush1.bf16.msra.mxu0 0
        %1312 = vmatprep.subr.bf16.mxu0 0
        %1313 = vmatpush1.bf16.msra.mxu0 0
        %1314 = vmatprep.subr.bf16.mxu0 0
        %1315 = vmatpush1.bf16.msra.mxu0 0
        %1316 = vmatprep.subr.bf16.mxu0 0
        %1317 = vmatpush1.bf16.msra.mxu0 0
        %1318 = vmatprep.subr.bf16.mxu0 0
        %1319 = vmatpush1.bf16.msra.mxu0 0
        %1320 = vmatprep.subr.bf16.mxu0 0
        %1321 = vmatpush1.bf16.msra.mxu0 0
        %1322 = vmatprep.subr.bf16.mxu0 0
        %1323 = vmatpush1.bf16.msra.mxu0 0
        %1324 = vmatprep.subr.bf16.mxu0 0
        %1325 = vmatpush1.bf16.msra.mxu0 0
        %1326 = vmatprep.subr.bf16.mxu0 0
        %1327 = vmatpush1.bf16.msra.mxu0 0
        %1328 = vmatprep.subr.bf16.mxu0 0
        %1329 = vmatpush1.bf16.msra.mxu0 0
        %1330 = vmatprep.mubr.bf16.mxu0 0
        %1331 = vmatmul.mubr.bf16.gmra.mrb[0].mxu0 %v1293
        %v1332 = vpop.f32.mrb[0].mxu0
        %v1333 = vadd.f32 0.0, %v1332
        %v1334 = vpop.f32.mrb[0].mxu0
        %v1335 = vpop.f32.mrb[0].mxu0
        %v1336 = vpop.f32.mrb[0].mxu0
        %1337 = vdwg.mxu0
        %v1339 = vsel %vm1072, %v1180, 0
        %v1342 = vsel %vm1136, %v1064, 0
        %1344 = vmatprep.subr.bf16.mxu0 0
        %1345 = vmatpush1.bf16.msra.mxu0 %v1342
        %1346 = vmatprep.subr.bf16.mxu0 0
        %1347 = vmatpush1.bf16.msra.mxu0 0
        %1348 = vmatprep.subr.bf16.mxu0 0
        %1349 = vmatpush1.bf16.msra.mxu0 0
        %1350 = vmatprep.subr.bf16.mxu0 0
        %1351 = vmatpush1.bf16.msra.mxu0 0
        %1352 = vmatprep.subr.bf16.mxu0 0
        %1353 = vmatpush1.bf16.msra.mxu0 0
        %1354 = vmatprep.subr.bf16.mxu0 0
        %1355 = vmatpush1.bf16.msra.mxu0 0
        %1356 = vmatprep.subr.bf16.mxu0 0
        %1357 = vmatpush1.bf16.msra.mxu0 0
        %1358 = vmatprep.subr.bf16.mxu0 0
        %1359 = vmatpush1.bf16.msra.mxu0 0
        %1360 = vmatprep.subr.bf16.mxu0 0
        %1361 = vmatpush1.bf16.msra.mxu0 0
        %1362 = vmatprep.subr.bf16.mxu0 0
        %1363 = vmatpush1.bf16.msra.mxu0 0
        %1364 = vmatprep.subr.bf16.mxu0 0
        %1365 = vmatpush1.bf16.msra.mxu0 0
        %1366 = vmatprep.subr.bf16.mxu0 0
        %1367 = vmatpush1.bf16.msra.mxu0 0
        %1368 = vmatprep.subr.bf16.mxu0 0
        %1369 = vmatpush1.bf16.msra.mxu0 0
        %1370 = vmatprep.subr.bf16.mxu0 0
        %1371 = vmatpush1.bf16.msra.mxu0 0
        %1372 = vmatprep.subr.bf16.mxu0 0
        %1373 = vmatpush1.bf16.msra.mxu0 0
        %1374 = vmatprep.subr.bf16.mxu0 0
        %1375 = vmatpush1.bf16.msra.mxu0 0
        %1376 = vmatprep.mubr.bf16.mxu0 0
        %1377 = vmatmul.mubr.bf16.gmra.mrb[0].mxu0 %v1339
        %v1378 = vpop.f32.mrb[0].mxu0
        %v1379 = vadd.f32 %v1333, %v1378
        %v1380 = vpop.f32.mrb[0].mxu0
        %v1381 = vpop.f32.mrb[0].mxu0
        %v1382 = vpop.f32.mrb[0].mxu0
        %1383 = vdwg.mxu0
        %1384 = vrot.lane.b32.xlu0 %v1068, 112
        %v1385 = vpop.permute.xlu0 %1384
        %1386 = vrot.lane.b32.xlu0 %v1068, 80
        %v1387 = vpop.permute.xlu0 %1386
        %v1389 = vsel %vm1072, %v1385, 0
        %v1392 = vsel %vm1072, %v1387, 0
        %1394 = vmatprep.subr.bf16.mxu0 0
        %1395 = vmatpush1.bf16.xpose.msra.mxu0 %v1392
        %1396 = vmatprep.subr.bf16.mxu0 0
        %1397 = vmatpush1.bf16.xpose.msra.mxu0 0
        %1398 = vmatprep.subr.bf16.mxu0 0
        %1399 = vmatpush1.bf16.xpose.msra.mxu0 0
        %1400 = vmatprep.subr.bf16.mxu0 0
        %1401 = vmatpush1.bf16.xpose.msra.mxu0 0
        %1402 = vmatprep.subr.bf16.mxu0 0
        %1403 = vmatpush1.bf16.xpose.msra.mxu0 0
        %1404 = vmatprep.subr.bf16.mxu0 0
        %1405 = vmatpush1.bf16.xpose.msra.mxu0 0
        %1406 = vmatprep.subr.bf16.mxu0 0
        %1407 = vmatpush1.bf16.xpose.msra.mxu0 0
        %1408 = vmatprep.subr.bf16.mxu0 0
        %1409 = vmatpush1.bf16.xpose.msra.mxu0 0
        %1410 = vmatprep.subr.bf16.mxu0 0
        %1411 = vmatpush1.bf16.xpose.msra.mxu0 0
        %1412 = vmatprep.subr.bf16.mxu0 0
        %1413 = vmatpush1.bf16.xpose.msra.mxu0 0
        %1414 = vmatprep.subr.bf16.mxu0 0
        %1415 = vmatpush1.bf16.xpose.msra.mxu0 0
        %1416 = vmatprep.subr.bf16.mxu0 0
        %1417 = vmatpush1.bf16.xpose.msra.mxu0 0
        %1418 = vmatprep.subr.bf16.mxu0 0
        %1419 = vmatpush1.bf16.xpose.msra.mxu0 0
        %1420 = vmatprep.subr.bf16.mxu0 0
        %1421 = vmatpush1.bf16.xpose.msra.mxu0 0
        %1422 = vmatprep.subr.bf16.mxu0 0
        %1423 = vmatpush1.bf16.xpose.msra.mxu0 0
        %1424 = vmatprep.subr.bf16.mxu0 0
        %1425 = vmatpush1.bf16.xpose.msra.mxu0 0
        %1426 = vmatprep.mubr.bf16.mxu0 0
        %1427 = vmatmul.mubr.bf16.gmra.mrb[0].mxu0 %v1389
        %v1428 = vpop.f32.mrb[0].mxu0
        %v1429 = vadd.f32 0.0, %v1428
        %v1430 = vpop.f32.mrb[0].mxu0
        %v1431 = vpop.f32.mrb[0].mxu0
        %v1432 = vpop.f32.mrb[0].mxu0
        %1433 = vdwg.mxu0
        %v1434 = vsel %vm1072, %v1429, -inf
        %1435 = vmax.xlane.f32.xlu0 %v1434
        %v1436 = vpop.xlane.xlu0 %1435
        %v1437 = vsub.f32 %v1429, %v1436
        %v1438 = vmul.f32 %v1437, 1.442695
        %v1439 = vpow.pop %v1438
        %v1440 = vsel %vm1072, %v1439, 0.0
        %1441 = vadd.xlane.f32.xlu0 %v1440
        %v1442 = vpop.xlane.xlu0 %1441
        %v1443 = vrcp.pop %v1442
        %v1444 = vmul.f32 %v1439, %v1443
        %v1445 = vpack.c.bf16 %v1444, %v1444
        %1446 = vrot.lane.b32.xlu0 %v1068, 48
        %v1447 = vpop.permute.xlu0 %1446
        %v1449 = vsel %vm1072, %v1445, 0
        %v1452 = vsel %vm1136, %v1447, 0
        %1454 = vmatprep.subr.bf16.mxu0 0
        %1455 = vmatpush1.bf16.msra.mxu0 %v1452
        %1456 = vmatprep.subr.bf16.mxu0 0
        %1457 = vmatpush1.bf16.msra.mxu0 0
        %1458 = vmatprep.subr.bf16.mxu0 0
        %1459 = vmatpush1.bf16.msra.mxu0 0
        %1460 = vmatprep.subr.bf16.mxu0 0
        %1461 = vmatpush1.bf16.msra.mxu0 0
        %1462 = vmatprep.subr.bf16.mxu0 0
        %1463 = vmatpush1.bf16.msra.mxu0 0
        %1464 = vmatprep.subr.bf16.mxu0 0
        %1465 = vmatpush1.bf16.msra.mxu0 0
        %1466 = vmatprep.subr.bf16.mxu0 0
        %1467 = vmatpush1.bf16.msra.mxu0 0
        %1468 = vmatprep.subr.bf16.mxu0 0
        %1469 = vmatpush1.bf16.msra.mxu0 0
        %1470 = vmatprep.subr.bf16.mxu0 0
        %1471 = vmatpush1.bf16.msra.mxu0 0
        %1472 = vmatprep.subr.bf16.mxu0 0
        %1473 = vmatpush1.bf16.msra.mxu0 0
        %1474 = vmatprep.subr.bf16.mxu0 0
        %1475 = vmatpush1.bf16.msra.mxu0 0
        %1476 = vmatprep.subr.bf16.mxu0 0
        %1477 = vmatpush1.bf16.msra.mxu0 0
        %1478 = vmatprep.subr.bf16.mxu0 0
        %1479 = vmatpush1.bf16.msra.mxu0 0
        %1480 = vmatprep.subr.bf16.mxu0 0
        %1481 = vmatpush1.bf16.msra.mxu0 0
        %1482 = vmatprep.subr.bf16.mxu0 0
        %1483 = vmatpush1.bf16.msra.mxu0 0
        %1484 = vmatprep.subr.bf16.mxu0 0
        %1485 = vmatpush1.bf16.msra.mxu0 0
        %1486 = vmatprep.mubr.bf16.mxu0 0
        %1487 = vmatmul.mubr.bf16.gmra.mrb[0].mxu0 %v1449
        %v1488 = vpop.f32.mrb[0].mxu0
        %v1489 = vadd.f32 0.0, %v1488
        %v1490 = vpop.f32.mrb[0].mxu0
        %v1491 = vpop.f32.mrb[0].mxu0
        %v1492 = vpop.f32.mrb[0].mxu0
        %1493 = vdwg.mxu0
        %v1494 = vpack.c.bf16 %v1489, %v1489
        %v1496 = vsel %vm1072, %v1494, 0
        %v1499 = vsel %vm1136, %v1066, 0
        %1501 = vmatprep.subr.bf16.mxu0 0
        %1502 = vmatpush1.bf16.msra.mxu0 %v1499
        %1503 = vmatprep.subr.bf16.mxu0 0
        %1504 = vmatpush1.bf16.msra.mxu0 0
        %1505 = vmatprep.subr.bf16.mxu0 0
        %1506 = vmatpush1.bf16.msra.mxu0 0
        %1507 = vmatprep.subr.bf16.mxu0 0
        %1508 = vmatpush1.bf16.msra.mxu0 0
        %1509 = vmatprep.subr.bf16.mxu0 0
        %1510 = vmatpush1.bf16.msra.mxu0 0
        %1511 = vmatprep.subr.bf16.mxu0 0
        %1512 = vmatpush1.bf16.msra.mxu0 0
        %1513 = vmatprep.subr.bf16.mxu0 0
        %1514 = vmatpush1.bf16.msra.mxu0 0
        %1515 = vmatprep.subr.bf16.mxu0 0
        %1516 = vmatpush1.bf16.msra.mxu0 0
        %1517 = vmatprep.subr.bf16.mxu0 0
        %1518 = vmatpush1.bf16.msra.mxu0 0
        %1519 = vmatprep.subr.bf16.mxu0 0
        %1520 = vmatpush1.bf16.msra.mxu0 0
        %1521 = vmatprep.subr.bf16.mxu0 0
        %1522 = vmatpush1.bf16.msra.mxu0 0
        %1523 = vmatprep.subr.bf16.mxu0 0
        %1524 = vmatpush1.bf16.msra.mxu0 0
        %1525 = vmatprep.subr.bf16.mxu0 0
        %1526 = vmatpush1.bf16.msra.mxu0 0
        %1527 = vmatprep.subr.bf16.mxu0 0
        %1528 = vmatpush1.bf16.msra.mxu0 0
        %1529 = vmatprep.subr.bf16.mxu0 0
        %1530 = vmatpush1.bf16.msra.mxu0 0
        %1531 = vmatprep.subr.bf16.mxu0 0
        %1532 = vmatpush1.bf16.msra.mxu0 0
        %1533 = vmatprep.mubr.bf16.mxu0 0
        %1534 = vmatmul.mubr.bf16.gmra.mrb[0].mxu0 %v1496
        %v1535 = vpop.f32.mrb[0].mxu0
        %v1536 = vadd.f32 0.0, %v1535
        %v1537 = vpop.f32.mrb[0].mxu0
        %v1538 = vpop.f32.mrb[0].mxu0
        %v1539 = vpop.f32.mrb[0].mxu0
        %1540 = vdwg.mxu0
        %v1541 = vadd.f32 %v1379, %v1536
        %1542 = vrot.lane.b32.xlu0 %v1068, 104
        %v1543 = vpop.permute.xlu0 %1542
        %1544 = vrot.lane.b32.xlu0 %v1068, 72
        %v1545 = vpop.permute.xlu0 %1544
        %v1547 = vsel %vm1072, %v1543, 0
        %v1550 = vsel %vm1072, %v1545, 0
        %1552 = vmatprep.subr.bf16.mxu0 0
        %1553 = vmatpush1.bf16.xpose.msra.mxu0 %v1550
        %1554 = vmatprep.subr.bf16.mxu0 0
        %1555 = vmatpush1.bf16.xpose.msra.mxu0 0
        %1556 = vmatprep.subr.bf16.mxu0 0
        %1557 = vmatpush1.bf16.xpose.msra.mxu0 0
        %1558 = vmatprep.subr.bf16.mxu0 0
        %1559 = vmatpush1.bf16.xpose.msra.mxu0 0
        %1560 = vmatprep.subr.bf16.mxu0 0
        %1561 = vmatpush1.bf16.xpose.msra.mxu0 0
        %1562 = vmatprep.subr.bf16.mxu0 0
        %1563 = vmatpush1.bf16.xpose.msra.mxu0 0
        %1564 = vmatprep.subr.bf16.mxu0 0
        %1565 = vmatpush1.bf16.xpose.msra.mxu0 0
        %1566 = vmatprep.subr.bf16.mxu0 0
        %1567 = vmatpush1.bf16.xpose.msra.mxu0 0
        %1568 = vmatprep.subr.bf16.mxu0 0
        %1569 = vmatpush1.bf16.xpose.msra.mxu0 0
        %1570 = vmatprep.subr.bf16.mxu0 0
        %1571 = vmatpush1.bf16.xpose.msra.mxu0 0
        %1572 = vmatprep.subr.bf16.mxu0 0
        %1573 = vmatpush1.bf16.xpose.msra.mxu0 0
        %1574 = vmatprep.subr.bf16.mxu0 0
        %1575 = vmatpush1.bf16.xpose.msra.mxu0 0
        %1576 = vmatprep.subr.bf16.mxu0 0
        %1577 = vmatpush1.bf16.xpose.msra.mxu0 0
        %1578 = vmatprep.subr.bf16.mxu0 0
        %1579 = vmatpush1.bf16.xpose.msra.mxu0 0
        %1580 = vmatprep.subr.bf16.mxu0 0
        %1581 = vmatpush1.bf16.xpose.msra.mxu0 0
        %1582 = vmatprep.subr.bf16.mxu0 0
        %1583 = vmatpush1.bf16.xpose.msra.mxu0 0
        %1584 = vmatprep.mubr.bf16.mxu0 0
        %1585 = vmatmul.mubr.bf16.gmra.mrb[0].mxu0 %v1547
        %v1586 = vpop.f32.mrb[0].mxu0
        %v1587 = vadd.f32 0.0, %v1586
        %v1588 = vpop.f32.mrb[0].mxu0
        %v1589 = vpop.f32.mrb[0].mxu0
        %v1590 = vpop.f32.mrb[0].mxu0
        %1591 = vdwg.mxu0
        %v1592 = vsel %vm1072, %v1587, -inf
        %1593 = vmax.xlane.f32.xlu0 %v1592
        %v1594 = vpop.xlane.xlu0 %1593
        %v1595 = vsub.f32 %v1587, %v1594
        %v1596 = vmul.f32 %v1595, 1.442695
        %v1597 = vpow.pop %v1596
        %v1598 = vsel %vm1072, %v1597, 0.0
        %1599 = vadd.xlane.f32.xlu0 %v1598
        %v1600 = vpop.xlane.xlu0 %1599
        %v1601 = vrcp.pop %v1600
        %v1602 = vmul.f32 %v1597, %v1601
        %v1603 = vpack.c.bf16 %v1602, %v1602
        %1604 = vrot.lane.b32.xlu0 %v1068, 40
        %v1605 = vpop.permute.xlu0 %1604
        %v1607 = vsel %vm1072, %v1603, 0
        %v1610 = vsel %vm1136, %v1605, 0
        %1612 = vmatprep.subr.bf16.mxu0 0
        %1613 = vmatpush1.bf16.msra.mxu0 %v1610
        %1614 = vmatprep.subr.bf16.mxu0 0
        %1615 = vmatpush1.bf16.msra.mxu0 0
        %1616 = vmatprep.subr.bf16.mxu0 0
        %1617 = vmatpush1.bf16.msra.mxu0 0
        %1618 = vmatprep.subr.bf16.mxu0 0
        %1619 = vmatpush1.bf16.msra.mxu0 0
        %1620 = vmatprep.subr.bf16.mxu0 0
        %1621 = vmatpush1.bf16.msra.mxu0 0
        %1622 = vmatprep.subr.bf16.mxu0 0
        %1623 = vmatpush1.bf16.msra.mxu0 0
        %1624 = vmatprep.subr.bf16.mxu0 0
        %1625 = vmatpush1.bf16.msra.mxu0 0
        %1626 = vmatprep.subr.bf16.mxu0 0
        %1627 = vmatpush1.bf16.msra.mxu0 0
        %1628 = vmatprep.subr.bf16.mxu0 0
        %1629 = vmatpush1.bf16.msra.mxu0 0
        %1630 = vmatprep.subr.bf16.mxu0 0
        %1631 = vmatpush1.bf16.msra.mxu0 0
        %1632 = vmatprep.subr.bf16.mxu0 0
        %1633 = vmatpush1.bf16.msra.mxu0 0
        %1634 = vmatprep.subr.bf16.mxu0 0
        %1635 = vmatpush1.bf16.msra.mxu0 0
        %1636 = vmatprep.subr.bf16.mxu0 0
        %1637 = vmatpush1.bf16.msra.mxu0 0
        %1638 = vmatprep.subr.bf16.mxu0 0
        %1639 = vmatpush1.bf16.msra.mxu0 0
        %1640 = vmatprep.subr.bf16.mxu0 0
        %1641 = vmatpush1.bf16.msra.mxu0 0
        %1642 = vmatprep.subr.bf16.mxu0 0
        %1643 = vmatpush1.bf16.msra.mxu0 0
        %1644 = vmatprep.mubr.bf16.mxu0 0
        %1645 = vmatmul.mubr.bf16.gmra.mrb[0].mxu0 %v1607
        %v1646 = vpop.f32.mrb[0].mxu0
        %v1647 = vadd.f32 0.0, %v1646
        %v1648 = vpop.f32.mrb[0].mxu0
        %v1649 = vpop.f32.mrb[0].mxu0
        %v1650 = vpop.f32.mrb[0].mxu0
        %1651 = vdwg.mxu0
        %v1652 = vpack.c.bf16 %v1647, %v1647
        %v1654 = vsel %vm1072, %v1652, 0
        %v1657 = vsel %vm1136, %v1067, 0
        %1659 = vmatprep.subr.bf16.mxu0 0
        %1660 = vmatpush1.bf16.msra.mxu0 %v1657
        %1661 = vmatprep.subr.bf16.mxu0 0
        %1662 = vmatpush1.bf16.msra.mxu0 0
        %1663 = vmatprep.subr.bf16.mxu0 0
        %1664 = vmatpush1.bf16.msra.mxu0 0
        %1665 = vmatprep.subr.bf16.mxu0 0
        %1666 = vmatpush1.bf16.msra.mxu0 0
        %1667 = vmatprep.subr.bf16.mxu0 0
        %1668 = vmatpush1.bf16.msra.mxu0 0
        %1669 = vmatprep.subr.bf16.mxu0 0
        %1670 = vmatpush1.bf16.msra.mxu0 0
        %1671 = vmatprep.subr.bf16.mxu0 0
        %1672 = vmatpush1.bf16.msra.mxu0 0
        %1673 = vmatprep.subr.bf16.mxu0 0
        %1674 = vmatpush1.bf16.msra.mxu0 0
        %1675 = vmatprep.subr.bf16.mxu0 0
        %1676 = vmatpush1.bf16.msra.mxu0 0
        %1677 = vmatprep.subr.bf16.mxu0 0
        %1678 = vmatpush1.bf16.msra.mxu0 0
        %1679 = vmatprep.subr.bf16.mxu0 0
        %1680 = vmatpush1.bf16.msra.mxu0 0
        %1681 = vmatprep.subr.bf16.mxu0 0
        %1682 = vmatpush1.bf16.msra.mxu0 0
        %1683 = vmatprep.subr.bf16.mxu0 0
        %1684 = vmatpush1.bf16.msra.mxu0 0
        %1685 = vmatprep.subr.bf16.mxu0 0
        %1686 = vmatpush1.bf16.msra.mxu0 0
        %1687 = vmatprep.subr.bf16.mxu0 0
        %1688 = vmatpush1.bf16.msra.mxu0 0
        %1689 = vmatprep.subr.bf16.mxu0 0
        %1690 = vmatpush1.bf16.msra.mxu0 0
        %1691 = vmatprep.mubr.bf16.mxu0 0
        %1692 = vmatmul.mubr.bf16.gmra.mrb[0].mxu0 %v1654
        %v1693 = vpop.f32.mrb[0].mxu0
        %v1694 = vadd.f32 0.0, %v1693
        %v1695 = vpop.f32.mrb[0].mxu0
        %v1696 = vpop.f32.mrb[0].mxu0
        %v1697 = vpop.f32.mrb[0].mxu0
        %1698 = vdwg.mxu0
        %v1699 = vadd.f32 %v1541, %v1694
        %v1700 = vadd.f32 %v965, %v1699
        %v1701 = vld [vmem:[%s781] sm:$0x1]
        %v1703 = vlaneseq
        %v1704 = vshrl.u32 %v1703, 7
        %v1705 = vsub.s32 0, %v1704
        %v1706 = vrot.slane %v1701, %v1705
        %v1708 = vadd.f32 %v1700, %v1706
        %v1709 = vld [vmem:[%s805] sm:$0x1]
        %v1710 = vld [vmem:[%s813] sm:$0x1]
        %v1711 = vsel %vm968, %v1708, 0.0
        %1712 = vadd.xlane.f32.xlu0 %v1711
        %v1713 = vpop.xlane.xlu0 %1712
        %v1714 = vmul.f32 %v1713, %v972
        %v1715 = vsub.f32 %v1708, %v1714
        %v1716 = vmul.f32 %v1715, %v1715
        %v1717 = vsel %vm968, %v1716, 0.0
        %1718 = vadd.xlane.f32.xlu0 %v1717
        %v1719 = vpop.xlane.xlu0 %1718
        %v1720 = vmul.f32 %v1719, %v972
        %v1721 = vadd.f32 %v1720, 1e-05
        %v1722 = vrsqrt.pop %v1721
        %v1723 = vmul.f32 %v1715, %v1722
        %v1725 = vlaneseq
        %v1726 = vshrl.u32 %v1725, 7
        %v1727 = vsub.s32 0, %v1726
        %v1728 = vrot.slane %v1709, %v1727
        %v1730 = vmul.f32 %v1723, %v1728
        %v1732 = vlaneseq
        %v1733 = vshrl.u32 %v1732, 7
        %v1734 = vsub.s32 0, %v1733
        %v1735 = vrot.slane %v1710, %v1734
        %v1737 = vadd.f32 %v1730, %v1735
        %v1738 = vpack.c.bf16 %v1737, %v1737
        %v1739 = vld [vmem:[%s951] sm:$0xf]
        %v1740 = vld [vmem:[%s951 + $0x4] sm:$0xf]
        %v1741 = vld [vmem:[%s951 + $0x8] sm:$0xf]
        %v1742 = vld [vmem:[%s951 + $0xc] sm:$0xf]
        %v1743 = vld [vmem:[%s821] sm:$0x1]
        %v1745 = vlaneseq
        %v1746 = vshrl.u32 %v1745, 7
        %v1747 = vsub.s32 0, %v1746
        %v1748 = vrot.slane %v1743, %v1747
        %v1754 = vunpack.c.l.b16 %v1739
        %v1755 = vunpack.c.l.b16 %v1740
        %v1756 = vunpack.c.l.b16 %v1741
        %v1757 = vunpack.c.l.b16 %v1742
        %v1758 = vpack.c.b16 %v1755, %v1754
        %v1759 = vpack.c.b16 %v1757, %v1756
        %v1763 = vsel %vm968, %v1738, 0
        %1765 = vmatprep.subr.bf16.mxu0 0
        %1766 = vmatpush1.bf16.msra.mxu0 %v1758
        %1767 = vmatprep.subr.bf16.mxu0 0
        %1768 = vmatpush1.bf16.msra.mxu0 %v1759
        %1769 = vmatprep.subr.bf16.mxu0 0
        %1770 = vmatpush1.bf16.msra.mxu0 0
        %1771 = vmatprep.subr.bf16.mxu0 0
        %1772 = vmatpush1.bf16.msra.mxu0 0
        %1773 = vmatprep.subr.bf16.mxu0 0
        %1774 = vmatpush1.bf16.msra.mxu0 0
        %1775 = vmatprep.subr.bf16.mxu0 0
        %1776 = vmatpush1.bf16.msra.mxu0 0
        %1777 = vmatprep.subr.bf16.mxu0 0
        %1778 = vmatpush1.bf16.msra.mxu0 0
        %1779 = vmatprep.subr.bf16.mxu0 0
        %1780 = vmatpush1.bf16.msra.mxu0 0
        %1781 = vmatprep.subr.bf16.mxu0 0
        %1782 = vmatpush1.bf16.msra.mxu0 0
        %1783 = vmatprep.subr.bf16.mxu0 0
        %1784 = vmatpush1.bf16.msra.mxu0 0
        %1785 = vmatprep.subr.bf16.mxu0 0
        %1786 = vmatpush1.bf16.msra.mxu0 0
        %1787 = vmatprep.subr.bf16.mxu0 0
        %1788 = vmatpush1.bf16.msra.mxu0 0
        %1789 = vmatprep.subr.bf16.mxu0 0
        %1790 = vmatpush1.bf16.msra.mxu0 0
        %1791 = vmatprep.subr.bf16.mxu0 0
        %1792 = vmatpush1.bf16.msra.mxu0 0
        %1793 = vmatprep.subr.bf16.mxu0 0
        %1794 = vmatpush1.bf16.msra.mxu0 0
        %1795 = vmatprep.subr.bf16.mxu0 0
        %1796 = vmatpush1.bf16.msra.mxu0 0
        %1797 = vmatprep.mubr.bf16.mxu0 0
        %1798 = vmatmul.mubr.bf16.gmra.mrb[0].mxu0 %v1763
        %v1799 = vpop.f32.mrb[0].mxu0
        %v1800 = vadd.f32 %v1748, %v1799
        %v1801 = vpop.f32.mrb[0].mxu0
        %v1802 = vpop.f32.mrb[0].mxu0
        %v1803 = vpop.f32.mrb[0].mxu0
        %1804 = vdwg.mxu0
        %v1805 = vmax.f32 %v1800, 0.0
        %v1806 = vpack.c.bf16 %v1805, %v1805
        %v1807 = vld [vmem:[%s956] sm:$0xf]
        %v1808 = vld [vmem:[%s956 + $0x4] sm:$0xf]
        %v1809 = vld [vmem:[%s956 + $0x8] sm:$0xf]
        %v1810 = vld [vmem:[%s956 + $0xc] sm:$0xf]
        %v1811 = vld [vmem:[%s956 + $0x10] sm:$0xf]
        %v1812 = vld [vmem:[%s956 + $0x14] sm:$0xf]
        %v1813 = vld [vmem:[%s956 + $0x18] sm:$0xf]
        %v1814 = vld [vmem:[%s956 + $0x1c] sm:$0xf]
        %v1815 = vld [vmem:[%s829] sm:$0x1]
        %v1817 = vlaneseq
        %v1818 = vshrl.u32 %v1817, 7
        %v1819 = vsub.s32 0, %v1818
        %v1820 = vrot.slane %v1815, %v1819
        %v1830 = vunpack.c.l.b16 %v1807
        %v1831 = vunpack.c.l.b16 %v1808
        %v1832 = vunpack.c.l.b16 %v1809
        %v1833 = vunpack.c.l.b16 %v1810
        %v1834 = vunpack.c.l.b16 %v1811
        %v1835 = vunpack.c.l.b16 %v1812
        %v1836 = vunpack.c.l.b16 %v1813
        %v1837 = vunpack.c.l.b16 %v1814
        %v1838 = vpack.c.b16 %v1831, %v1830
        %v1839 = vpack.c.b16 %v1833, %v1832
        %v1840 = vpack.c.b16 %v1835, %v1834
        %v1841 = vpack.c.b16 %v1837, %v1836
        %vm1846 = vcmask 523264
        %v1848 = vsel %vm1846, %v1806, 0
        %1850 = vmatprep.subr.bf16.mxu0 0
        %1851 = vmatpush1.bf16.msra.mxu0 %v1838
        %1852 = vmatprep.subr.bf16.mxu0 0
        %1853 = vmatpush1.bf16.msra.mxu0 %v1839
        %1854 = vmatprep.subr.bf16.mxu0 0
        %1855 = vmatpush1.bf16.msra.mxu0 %v1840
        %1856 = vmatprep.subr.bf16.mxu0 0
        %1857 = vmatpush1.bf16.msra.mxu0 %v1841
        %1858 = vmatprep.subr.bf16.mxu0 0
        %1859 = vmatpush1.bf16.msra.mxu0 0
        %1860 = vmatprep.subr.bf16.mxu0 0
        %1861 = vmatpush1.bf16.msra.mxu0 0
        %1862 = vmatprep.subr.bf16.mxu0 0
        %1863 = vmatpush1.bf16.msra.mxu0 0
        %1864 = vmatprep.subr.bf16.mxu0 0
        %1865 = vmatpush1.bf16.msra.mxu0 0
        %1866 = vmatprep.subr.bf16.mxu0 0
        %1867 = vmatpush1.bf16.msra.mxu0 0
        %1868 = vmatprep.subr.bf16.mxu0 0
        %1869 = vmatpush1.bf16.msra.mxu0 0
        %1870 = vmatprep.subr.bf16.mxu0 0
        %1871 = vmatpush1.bf16.msra.mxu0 0
        %1872 = vmatprep.subr.bf16.mxu0 0
        %1873 = vmatpush1.bf16.msra.mxu0 0
        %1874 = vmatprep.subr.bf16.mxu0 0
        %1875 = vmatpush1.bf16.msra.mxu0 0
        %1876 = vmatprep.subr.bf16.mxu0 0
        %1877 = vmatpush1.bf16.msra.mxu0 0
        %1878 = vmatprep.subr.bf16.mxu0 0
        %1879 = vmatpush1.bf16.msra.mxu0 0
        %1880 = vmatprep.subr.bf16.mxu0 0
        %1881 = vmatpush1.bf16.msra.mxu0 0
        %1882 = vmatprep.mubr.bf16.mxu0 0
        %1883 = vmatmul.mubr.bf16.gmra.mrb[0].mxu0 %v1848
        %v1884 = vpop.f32.mrb[0].mxu0
        %v1885 = vadd.f32 %v1820, %v1884
        %v1886 = vpop.f32.mrb[0].mxu0
        %v1887 = vpop.f32.mrb[0].mxu0
        %v1888 = vpop.f32.mrb[0].mxu0
        %1889 = vdwg.mxu0
        %v1890 = vadd.f32 %v1708, %v1885
        %1891 = vst.msk [vmem:[#allocation2] sm:$0xff] %vm968, %v1890
        %p1892 = scmp.eq.s32.totalorder %s53, 1
        // Predicated region
        $region137: #{tpu_custom_call.1} parent=91 // pred_check
          %p1893 = pneg %p1892
        $region138: #{tpu_custom_call.1} parent=91 // pred_check_branch
          %1895 = sbr.rel (%p1893) target = $region140
        $region139: #{tpu_custom_call.1} parent=91 // pred_region
          %v1896 = vld [vmem:[%s13] sm:$0x1]
          %v1898 = vlaneseq
          %v1899 = vshrl.u32 %v1898, 7
          %v1900 = vsub.s32 0, %v1899
          %v1901 = vrot.slane %v1896, %v1900
          %v1903 = vmul.f32 %v1890, %v1901
          %v1904 = vsel %vm968, %v1903, 0.0
          %1905 = vadd.xlane.f32.xlu0 %v1904
          %v1906 = vpop.xlane.xlu0 %1905
          %v1907 = vrot.slane %v1906, 4
          %v1908 = vmax.f32 %v1906, %v1907
          %v1909 = vrot.slane %v1908, 2
          %v1910 = vmax.f32 %v1908, %v1909
          %v1911 = vrot.slane %v1910, 1
          %v1912 = vmax.f32 %v1910, %v1911
          %v1913 = vsub.f32 %v1906, %v1912
          %v1914 = vmul.f32 %v1913, 1.442695
          %v1915 = vpow.pop %v1914
          %v1916 = vrot.slane %v1915, 4
          %v1917 = vadd.f32 %v1915, %v1916
          %v1918 = vrot.slane %v1917, 2
          %v1919 = vadd.f32 %v1917, %v1918
          %v1920 = vrot.slane %v1919, 1
          %v1921 = vadd.f32 %v1919, %v1920
          %v1922 = vrcp.pop %v1921
          %v1923 = vmul.f32 %v1915, %v1922
          %v1924 = vmul.f32 %v1890, %v1923
          %v1925 = vsel %vm968, %v1924, 0.0
          %v1926 = vrot.slane %v1925, 4
          %v1927 = vadd.f32 %v1925, %v1926
          %v1928 = vrot.slane %v1927, 2
          %v1929 = vadd.f32 %v1927, %v1928
          %v1930 = vrot.slane %v1929, 1
          %v1931 = vadd.f32 %v1929, %v1930
          %v1932 = vpack.c.bf16 %v1931, %v1931
          %v1933 = vld [vmem:[%s14] sm:$0xf]
          %v1934 = vld [vmem:[%s14 + $0x4] sm:$0xf]
          %v1935 = vld [vmem:[%s14 + $0x8] sm:$0xf]
          %v1936 = vld [vmem:[%s14 + $0xc] sm:$0xf]
          %v1937 = vld [vmem:[%s15] sm:$0x1]
          %v1942 = vunpack.c.l.b16 %v1933
          %v1943 = vunpack.c.l.b16 %v1934
          %v1944 = vunpack.c.l.b16 %v1935
          %v1945 = vunpack.c.l.b16 %v1936
          %v1946 = vpack.c.b16 %v1943, %v1942
          %v1947 = vpack.c.b16 %v1945, %v1944
          %v1951 = vsel %vm968, %v1932, 0
          %1953 = vmatprep.subr.bf16.mxu0 0
          %1954 = vmatpush1.bf16.msra.mxu0 %v1946
          %1955 = vmatprep.subr.bf16.mxu0 0
          %1956 = vmatpush1.bf16.msra.mxu0 %v1947
          %1957 = vmatprep.subr.bf16.mxu0 0
          %1958 = vmatpush1.bf16.msra.mxu0 0
          %1959 = vmatprep.subr.bf16.mxu0 0
          %1960 = vmatpush1.bf16.msra.mxu0 0
          %1961 = vmatprep.subr.bf16.mxu0 0
          %1962 = vmatpush1.bf16.msra.mxu0 0
          %1963 = vmatprep.subr.bf16.mxu0 0
          %1964 = vmatpush1.bf16.msra.mxu0 0
          %1965 = vmatprep.subr.bf16.mxu0 0
          %1966 = vmatpush1.bf16.msra.mxu0 0
          %1967 = vmatprep.subr.bf16.mxu0 0
          %1968 = vmatpush1.bf16.msra.mxu0 0
          %1969 = vmatprep.subr.bf16.mxu0 0
          %1970 = vmatpush1.bf16.msra.mxu0 0
          %1971 = vmatprep.subr.bf16.mxu0 0
          %1972 = vmatpush1.bf16.msra.mxu0 0
          %1973 = vmatprep.subr.bf16.mxu0 0
          %1974 = vmatpush1.bf16.msra.mxu0 0
          %1975 = vmatprep.subr.bf16.mxu0 0
          %1976 = vmatpush1.bf16.msra.mxu0 0
          %1977 = vmatprep.subr.bf16.mxu0 0
          %1978 = vmatpush1.bf16.msra.mxu0 0
          %1979 = vmatprep.subr.bf16.mxu0 0
          %1980 = vmatpush1.bf16.msra.mxu0 0
          %1981 = vmatprep.subr.bf16.mxu0 0
          %1982 = vmatpush1.bf16.msra.mxu0 0
          %1983 = vmatprep.subr.bf16.mxu0 0
          %1984 = vmatpush1.bf16.msra.mxu0 0
          %1985 = vmatprep.mubr.bf16.mxu0 0
          %1986 = vmatmul.mubr.bf16.gmra.mrb[0].mxu0 %v1951
          %v1987 = vpop.f32.mrb[0].mxu0
          %v1988 = vadd.f32 %v1937, %v1987
          %v1989 = vpop.f32.mrb[0].mxu0
          %v1990 = vpop.f32.mrb[0].mxu0
          %v1991 = vpop.f32.mrb[0].mxu0
          %1992 = vdwg.mxu0
          %v1993 = vmax.f32 %v1988, 0.0
          %v1994 = vpack.c.bf16 %v1993, %v1993
          %v1995 = vld [vmem:[#allocation18] sm:$0xf]
          %v1996 = vld [vmem:[#allocation18 + $0x4] sm:$0xf]
          %v1997 = vld [vmem:[#allocation18 + $0x8] sm:$0xf]
          %v1998 = vld [vmem:[#allocation18 + $0xc] sm:$0xf]
          %v1999 = vld [vmem:[%s17] sm:$0x1]
          %v2004 = vunpack.c.l.b16 %v1995
          %v2005 = vunpack.c.l.b16 %v1996
          %v2006 = vunpack.c.l.b16 %v1997
          %v2007 = vunpack.c.l.b16 %v1998
          %v2008 = vpack.c.b16 %v2005, %v2004
          %v2009 = vpack.c.b16 %v2007, %v2006
          %v2013 = vsel %vm968, %v1994, 0
          %2015 = vmatprep.subr.bf16.mxu0 0
          %2016 = vmatpush1.bf16.msra.mxu0 %v2008
          %2017 = vmatprep.subr.bf16.mxu0 0
          %2018 = vmatpush1.bf16.msra.mxu0 %v2009
          %2019 = vmatprep.subr.bf16.mxu0 0
          %2020 = vmatpush1.bf16.msra.mxu0 0
          %2021 = vmatprep.subr.bf16.mxu0 0
          %2022 = vmatpush1.bf16.msra.mxu0 0
          %2023 = vmatprep.subr.bf16.mxu0 0
          %2024 = vmatpush1.bf16.msra.mxu0 0
          %2025 = vmatprep.subr.bf16.mxu0 0
          %2026 = vmatpush1.bf16.msra.mxu0 0
          %2027 = vmatprep.subr.bf16.mxu0 0
          %2028 = vmatpush1.bf16.msra.mxu0 0
          %2029 = vmatprep.subr.bf16.mxu0 0
          %2030 = vmatpush1.bf16.msra.mxu0 0
          %2031 = vmatprep.subr.bf16.mxu0 0
          %2032 = vmatpush1.bf16.msra.mxu0 0
          %2033 = vmatprep.subr.bf16.mxu0 0
          %2034 = vmatpush1.bf16.msra.mxu0 0
          %2035 = vmatprep.subr.bf16.mxu0 0
          %2036 = vmatpush1.bf16.msra.mxu0 0
          %2037 = vmatprep.subr.bf16.mxu0 0
          %2038 = vmatpush1.bf16.msra.mxu0 0
          %2039 = vmatprep.subr.bf16.mxu0 0
          %2040 = vmatpush1.bf16.msra.mxu0 0
          %2041 = vmatprep.subr.bf16.mxu0 0
          %2042 = vmatpush1.bf16.msra.mxu0 0
          %2043 = vmatprep.subr.bf16.mxu0 0
          %2044 = vmatpush1.bf16.msra.mxu0 0
          %2045 = vmatprep.subr.bf16.mxu0 0
          %2046 = vmatpush1.bf16.msra.mxu0 0
          %2047 = vmatprep.mubr.bf16.mxu0 0
          %2048 = vmatmul.mubr.bf16.gmra.mrb[0].mxu0 %v2013
          %v2049 = vpop.f32.mrb[0].mxu0
          %v2050 = vadd.f32 %v1999, %v2049
          %v2051 = vpop.f32.mrb[0].mxu0
          %v2052 = vpop.f32.mrb[0].mxu0
          %v2053 = vpop.f32.mrb[0].mxu0
          %2054 = vdwg.mxu0
          %2055 = vst [vmem:[%s936] sm:$0x1] %v2050
        $region140: #{tpu_custom_call.1} parent=91 // pred_fallthru
          _
        %s2056 = sand.u32 %s511, 1
        %s2057 = scalar_lea.sflag [#allocation5], %s2056
        %s2058 = sand.u32 %s511, 1
        %s2059 = scalar_lea.vmem [#allocation20], %s2058
        // Predicated region
        $region141: #{tpu_custom_call.1} parent=91 // pred_check
          %p2060 = pneg %p521
        $region142: #{tpu_custom_call.1} parent=91 // pred_check_branch
          %2062 = sbr.rel (%p2060) target = $region144
        $region143: #{tpu_custom_call.1} parent=91 // pred_region
          %s2064 = ssub.s32 16, 16
          %2065 = vsyncadd %s2057, %s2064
          %s2066 = smul.addr %s52, 16
          %s2067 = scalar_lea.hbm %s18, %s2066
          %s2069 = sshll.u32 %s2059, 4
          %s2070 = int_to_ptr.vmem [resolvable:$true] %s2069
          %2072 = dma.vmem_to_hbm [thread:$0]  %s2070, 16, %s2067, %s2057
        $region144: #{tpu_custom_call.1} parent=91 // pred_fallthru
          _
      $region92: #{tpu_custom_call.1} parent=5 // pred_fallthru
        _
      %p2073 = scmp.le.s32.totalorder 2, %s43
      // Predicated region
      $region145: #{tpu_custom_call.1} parent=5 // pred_check
        %p2074 = pneg %p2073
      $region146: #{tpu_custom_call.1} parent=5 // pred_check_branch
        %2076 = sbr.rel (%p2074) target = $region148
      $region147: #{tpu_custom_call.1} parent=5 // pred_region
        %s2077 = ssub.s32 %s43, 2
        // Predicated region
        $region149: #{tpu_custom_call.1} parent=147 // pred_check
          %p2078 = pneg %p527
        $region150: #{tpu_custom_call.1} parent=147 // pred_check_branch
          %2080 = sbr.rel (%p2078) target = $region152
        $region151: #{tpu_custom_call.1} parent=147 // pred_region
          %s2081 = sand.u32 %s512, 1
          %s2082 = scalar_lea.sflag [#allocation5], %s2081
          %s2083 = sand.u32 %s512, 1
          %s2084 = scalar_lea.vmem [#allocation20], %s2083
          %2085 = dma.done %s2082, 16
        $region152: #{tpu_custom_call.1} parent=147 // pred_fallthru
          _
      $region148: #{tpu_custom_call.1} parent=5 // pred_fallthru
        _
    $region6: #{tpu_custom_call.1} parent=1 // loop_footer
      %s47 = sadd.s32 1, %s43
    $region7: #{tpu_custom_call.1} parent=1 // loop_footer_branch
      %42 = sbr.rel target = $region3
    $region8: #{tpu_custom_call.1} parent=1 // loop_exit
      _
    %2086 = vsyncpa [#allocation4], 1
    %s2087 = scalar_lea.sflag [#allocation4], 1
    %2088 = vsyncpa %s2087, 1
    %2089 = vsyncpa [#allocation7], 1
    %s2090 = scalar_lea.sflag [#allocation7], 1
    %2091 = vsyncpa %s2090, 1
    %2092 = vsyncpa [#allocation10], 1
    %s2093 = scalar_lea.sflag [#allocation10], 1
    %2094 = vsyncpa %s2093, 1
    %2095 = vsyncpa [#allocation13], 1
    %s2096 = scalar_lea.sflag [#allocation13], 1
    %2097 = vsyncpa %s2096, 1
    %2098 = vsyncpa [#allocation16], 1
    %s2099 = scalar_lea.sflag [#allocation16], 1
    %2100 = vsyncpa %s2099, 1
    %2101 = vsyncpa [#allocation19], 1
    %2102 = vsyncpa [#allocation5], 1
    %s2103 = scalar_lea.sflag [#allocation5], 1
    %2104 = vsyncpa %s2103, 1

</llo_original>
